<compile_context>
chip_gen: v5e
topology: v5e:2x2
jax: 0.10.0
libtpu: 0.0.40
codegen_flags: <defaults>
</compile_context>

<pallas_src>
import math
from functools import partial

import jax
import jax.numpy as jnp
from jax.experimental import pallas as pl
from jax.experimental.pallas import tpu as pltpu


# ----------------------------------------------------------------------------
# Kernel helpers
# ----------------------------------------------------------------------------
def _dir_step(gx_t, h_ref, c_ref, whh_ref, H):
    """One LSTM cell step for one direction.

    gx_t   : (B, 4H) precomputed x @ W_ih^T + (b_ih + b_hh) for this time step
    h_ref  : (B, H) VMEM scratch (previous hidden, updated in place)
    c_ref  : (B, H) VMEM scratch (previous cell, updated in place)
    whh_ref: (H, 4H) resident recurrent weights (already transposed)
    """
    gates = gx_t + jnp.dot(h_ref[...], whh_ref[...],
                           preferred_element_type=jnp.float32)      # (B, 4H)

    # Full-tile activation: tanh on the g lanes [2H, 3H), sigmoid elsewhere.
    lane = jax.lax.broadcasted_iota(jnp.int32, gates.shape, 1)
    is_g = jnp.logical_and(lane >= 2 * H, lane < 3 * H)
    act = jnp.where(is_g, jnp.tanh(gates), jax.nn.sigmoid(gates))

    i = act[:, 0:H]
    f = act[:, H:2 * H]
    g = act[:, 2 * H:3 * H]
    o = act[:, 3 * H:4 * H]

    c_new = f * c_ref[...] + i * g
    h_new = o * jnp.tanh(c_new)
    c_ref[...] = c_new
    h_ref[...] = h_new
    return h_new


def _init_state(t, h_f, c_f, h_b, c_b):
    @pl.when(t == 0)
    def _():
        h_f[...] = jnp.zeros_like(h_f)
        c_f[...] = jnp.zeros_like(c_f)
        h_b[...] = jnp.zeros_like(h_b)
        c_b[...] = jnp.zeros_like(c_b)


# ----------------------------------------------------------------------------
# Pallas kernels
# ----------------------------------------------------------------------------
def _proj_kernel(x_ref, w_ref, b_ref, out_ref):
    """gates_x for BOTH directions in one matmul: (S*B, F) @ (F, 8H) + bias."""
    out_ref[...] = (jnp.dot(x_ref[...], w_ref[...],
                            preferred_element_type=jnp.float32) + b_ref[...])


def _bilstm_layer_kernel(gx_ref, whh_f_ref, whh_b_ref, out_ref,
                         h_f, c_f, h_b, c_b):
    """Fused fwd+bwd recurrence of one layer. Grid axis 0 = time (sequential).

    gx_ref : (S, B, 8H) resident; [..., :4H] = fwd gates_x, [..., 4H:] = bwd
    out_ref: (S, B, 2H) resident; [..., :H] = fwd hidden, [..., H:] = bwd
    """
    t = pl.program_id(0)
    S = pl.num_programs(0)
    B, H = h_f.shape
    G = 4 * H

    _init_state(t, h_f, c_f, h_b, c_b)
    tb = S - 1 - t

    gx_t = gx_ref[t]                     # (B, 8H)
    gx_tb = gx_ref[tb]                   # (B, 8H)

    hf_new = _dir_step(gx_t[:, 0:G], h_f, c_f, whh_f_ref, H)
    hb_new = _dir_step(gx_tb[:, G:2 * G], h_b, c_b, whh_b_ref, H)

    out_ref[t, :, 0:H] = hf_new
    out_ref[tb, :, H:2 * H] = hb_new


def _bilstm_layer_head_kernel(gx_ref, whh_f_ref, whh_b_ref, wfc_ref, bfc_ref,
                              y_ref, hall, h_f, c_f, h_b, c_b):
    """Last layer: fused fwd+bwd recurrence, hidden kept in VMEM scratch, and
    the Linear(2H -> 1) + Sigmoid head computed in the epilogue (t == S-1)."""
    t = pl.program_id(0)
    S = pl.num_programs(0)
    B, H = h_f.shape
    G = 4 * H

    _init_state(t, h_f, c_f, h_b, c_b)
    tb = S - 1 - t

    gx_t = gx_ref[t]
    gx_tb = gx_ref[tb]

    hf_new = _dir_step(gx_t[:, 0:G], h_f, c_f, whh_f_ref, H)
    hb_new = _dir_step(gx_tb[:, G:2 * G], h_b, c_b, whh_b_ref, H)

    hall[t, :, 0:H] = hf_new
    hall[tb, :, H:2 * H] = hb_new

    @pl.when(t == S - 1)
    def _():
        # sigmoid(h_all @ w_fc^T + b) as a VPU lane-reduction (no (2H,1) matmul).
        logits = jnp.sum(hall[...] * wfc_ref[...], axis=-1, keepdims=True)
        y_ref[...] = jax.nn.sigmoid(logits + bfc_ref[...])


# ----------------------------------------------------------------------------
# Wrappers
# ----------------------------------------------------------------------------
def _input_projection(x_flat, p_f, p_b):
    """x_flat: (S*B, F). Returns gates_x for both directions: (S*B, 8H)."""
    w_cat = jnp.concatenate([p_f["w_ih"].T, p_b["w_ih"].T],
                            axis=1).astype(jnp.float32)             # (F, 8H)
    b_cat = jnp.concatenate([p_f["b_ih"] + p_f["b_hh"],
                             p_b["b_ih"] + p_b["b_hh"]]).astype(jnp.float32)
    b_cat = b_cat[None, :]                                          # (1, 8H)
    N = x_flat.shape[0]
    G2 = w_cat.shape[1]
    return pl.pallas_call(
        _proj_kernel,
        out_shape=jax.ShapeDtypeStruct((N, G2), jnp.float32),
    )(x_flat.astype(jnp.float32), w_cat, b_cat)


def _bilstm_recurrence(gx3, p_f, p_b):
    """gx3: (S, B, 8H). Returns layer hidden states (S, B, 2H)."""
    S, B, G2 = gx3.shape
    H = p_f["w_hh"].shape[1]
    G = 4 * H
    whh_f = jnp.asarray(p_f["w_hh"].T, jnp.float32)                 # (H, 4H)
    whh_b = jnp.asarray(p_b["w_hh"].T, jnp.float32)                 # (H, 4H)

    return pl.pallas_call(
        _bilstm_layer_kernel,
        out_shape=jax.ShapeDtypeStruct((S, B, 2 * H), jnp.float32),
        grid_spec=pltpu.PrefetchScalarGridSpec(
            num_scalar_prefetch=0,
            grid=(S,),
            in_specs=[
                pl.BlockSpec((S, B, G2), lambda t: (0, 0, 0)),      # gates_x resident
                pl.BlockSpec((H, G), lambda t: (0, 0)),             # W_hh fwd resident
                pl.BlockSpec((H, G), lambda t: (0, 0)),             # W_hh bwd resident
            ],
            out_specs=pl.BlockSpec((S, B, 2 * H), lambda t: (0, 0, 0)),  # resident
            scratch_shapes=[
                pltpu.VMEM((B, H), jnp.float32),                    # h fwd
                pltpu.VMEM((B, H), jnp.float32),                    # c fwd
                pltpu.VMEM((B, H), jnp.float32),                    # h bwd
                pltpu.VMEM((B, H), jnp.float32),                    # c bwd
            ]),
        compiler_params=pltpu.CompilerParams(
            dimension_semantics=("arbitrary",)),                    # serial recurrence
    )(gx3, whh_f, whh_b)


def _bilstm_recurrence_with_head(gx3, p_f, p_b, fc_w, fc_b):
    """Last layer + fused FC/sigmoid head. Returns (S, B, 1)."""
    S, B, G2 = gx3.shape
    H = p_f["w_hh"].shape[1]
    G = 4 * H
    whh_f = jnp.asarray(p_f["w_hh"].T, jnp.float32)
    whh_b = jnp.asarray(p_b["w_hh"].T, jnp.float32)
    wfc = fc_w.reshape(1, 2 * H).astype(jnp.float32)
    bfc = fc_b.reshape(1, 1).astype(jnp.float32)

    return pl.pallas_call(
        _bilstm_layer_head_kernel,
        out_shape=jax.ShapeDtypeStruct((S, B, 1), jnp.float32),
        grid_spec=pltpu.PrefetchScalarGridSpec(
            num_scalar_prefetch=0,
            grid=(S,),
            in_specs=[
                pl.BlockSpec((S, B, G2), lambda t: (0, 0, 0)),      # gates_x resident
                pl.BlockSpec((H, G), lambda t: (0, 0)),
                pl.BlockSpec((H, G), lambda t: (0, 0)),
                pl.BlockSpec((1, 2 * H), lambda t: (0, 0)),         # fc weight
                pl.BlockSpec((1, 1), lambda t: (0, 0)),             # fc bias
            ],
            out_specs=pl.BlockSpec((S, B, 1), lambda t: (0, 0, 0)),
            scratch_shapes=[
                pltpu.VMEM((S, B, 2 * H), jnp.float32),             # hidden (stays in VMEM)
                pltpu.VMEM((B, H), jnp.float32),
                pltpu.VMEM((B, H), jnp.float32),
                pltpu.VMEM((B, H), jnp.float32),
                pltpu.VMEM((B, H), jnp.float32),
            ]),
        compiler_params=pltpu.CompilerParams(
            dimension_semantics=("arbitrary",)),
    )(gx3, whh_f, whh_b, wfc, bfc)


@partial(jax.jit, static_argnums=(2, 3))
def lstm_classifier_bidirectional_forward(x, params, hidden_size, num_layers):
    """x: (B, S, input_size) batch-first, like the PyTorch module. Returns (B, S, 1)."""
    B, S, _ = x.shape
    H = hidden_size
    # Time-major flattened layout: row = t*B + b.
    h_flat = jnp.transpose(x, (1, 0, 2)).astype(jnp.float32).reshape(S * B, -1)

    y = None
    for layer in range(num_layers):
        p_f = params[f"l{layer}_d0"]
        p_b = params[f"l{layer}_d1"]
        gx = _input_projection(h_flat, p_f, p_b)            # (S*B, 8H), hoisted matmul
        gx3 = gx.reshape(S, B, 8 * H)
        if layer == num_layers - 1:
            y = _bilstm_recurrence_with_head(gx3, p_f, p_b,
                                             params["fc_w"], params["fc_b"])
        else:
            out3 = _bilstm_recurrence(gx3, p_f, p_b)        # (S, B, 2H)
            h_flat = out3.reshape(S * B, 2 * H)
    return jnp.transpose(y, (1, 0, 2))                      # (B, S, 1)


# ----------------------------------------------------------------------------
# Deterministic parameter init (same shapes / init range as nn.LSTM + nn.Linear)
# ----------------------------------------------------------------------------
def init_params(key, input_size, hidden_size, num_layers):
    params = {}
    k = 1.0 / math.sqrt(hidden_size)
    for layer in range(num_layers):
        in_f = input_size if layer == 0 else 2 * hidden_size
        for d in range(2):  # 0 = forward, 1 = reverse
            key, k1, k2, k3, k4 = jax.random.split(key, 5)
            params[f"l{layer}_d{d}"] = dict(
                w_ih=jax.random.uniform(k1, (4 * hidden_size, in_f), jnp.float32, -k, k),
                w_hh=jax.random.uniform(k2, (4 * hidden_size, hidden_size), jnp.float32, -k, k),
                b_ih=jax.random.uniform(k3, (4 * hidden_size,), jnp.float32, -k, k),
                b_hh=jax.random.uniform(k4, (4 * hidden_size,), jnp.float32, -k, k),
            )
    kf = 1.0 / math.sqrt(2 * hidden_size)
    key, k1, k2 = jax.random.split(key, 3)
    params["fc_w"] = jax.random.uniform(k1, (1, 2 * hidden_size), jnp.float32, -kf, kf)
    params["fc_b"] = jax.random.uniform(k2, (1,), jnp.float32, -kf, kf)
    return params


# ----------------------------------------------------------------------------
# Pure-JAX reference (for correctness check)
# ----------------------------------------------------------------------------
def _ref_forward(x, params, hidden_size, num_layers):
    B, S, _ = x.shape
    h_seq = jnp.transpose(x, (1, 0, 2)).astype(jnp.float32)

    def run_dir(seq, p, reverse):
        def step(carry, xt):
            h, c = carry
            gates = xt @ p["w_ih"].T + h @ p["w_hh"].T + p["b_ih"] + p["b_hh"]
            i, f, g, o = jnp.split(gates, 4, axis=-1)
            i = jax.nn.sigmoid(i)
            f = jax.nn.sigmoid(f)
            g = jnp.tanh(g)
            o = jax.nn.sigmoid(o)
            c = f * c + i * g
            h = o * jnp.tanh(c)
            return (h, c), h

        init = (jnp.zeros((B, hidden_size), jnp.float32),
                jnp.zeros((B, hidden_size), jnp.float32))
        xs = seq[::-1] if reverse else seq
        _, ys = jax.lax.scan(step, init, xs)
        return ys[::-1] if reverse else ys

    for layer in range(num_layers):
        fwd = run_dir(h_seq, params[f"l{layer}_d0"], False)
        bwd = run_dir(h_seq, params[f"l{layer}_d1"], True)
        h_seq = jnp.concatenate([fwd, bwd], axis=-1)

    y = jax.nn.sigmoid(h_seq @ params["fc_w"].T + params["fc_b"])
    return jnp.transpose(y, (1, 0, 2))


# ----------------------------------------------------------------------------
if __name__ == "__main__":
    batch, seq, input_size, hidden_size, num_layers = 2, 8, 16, 32, 2

    key = jax.random.PRNGKey(0)
    key, pkey, xkey = jax.random.split(key, 3)
    params = init_params(pkey, input_size, hidden_size, num_layers)
    x = jax.random.normal(xkey, (batch, seq, input_size), jnp.float32)

    out = lstm_classifier_bidirectional_forward(x, params, hidden_size, num_layers)
    out = jax.block_until_ready(out)

    ref = jax.block_until_ready(_ref_forward(x, params, hidden_size, num_layers))

    assert out.shape == (batch, seq, 1), out.shape
    max_err = float(jnp.max(jnp.abs(out - ref)))
    assert max_err < 2e-3, f"mismatch vs reference: max_err={max_err}"

    print("KERNEL_OK")
</pallas_src>

<mosaic_0001>
module attributes {stable_mosaic.version = 11 : i64} {
  func.func @_proj_kernel(%arg0: memref<16x16xf32, #tpu.memory_space<vmem>>, %arg1: memref<16x256xf32, #tpu.memory_space<vmem>>, %arg2: memref<1x256xf32, #tpu.memory_space<vmem>>, %arg3: memref<16x256xf32, #tpu.memory_space<vmem>>) attributes {dimension_semantics = [], scalar_prefetch = 0 : i64, scratch_operands = 0 : i64, tpu.core_type = #tpu.core_type<tc>} {
    %c0 = arith.constant 0 : index
    %c0_0 = arith.constant 0 : index
    %0 = vector.load %arg0[%c0, %c0_0] : memref<16x16xf32, #tpu.memory_space<vmem>>, vector<16x16xf32>
    %c0_1 = arith.constant 0 : index
    %c0_2 = arith.constant 0 : index
    %1 = vector.load %arg1[%c0_1, %c0_2] : memref<16x256xf32, #tpu.memory_space<vmem>>, vector<16x256xf32>
    %cst = arith.constant dense<0.000000e+00> : vector<16x256xf32>
    %2 = tpu.matmul %0, %1, %cst {dimension_numbers = #tpu.dot_dimension_numbers<[1], [0], [0], [1], [0, 0, 1, 1], [], []>} : vector<16x16xf32>, vector<16x256xf32>, vector<16x256xf32> -> vector<16x256xf32>
    %c0_3 = arith.constant 0 : index
    %c0_4 = arith.constant 0 : index
    %3 = vector.load %arg2[%c0_3, %c0_4] : memref<1x256xf32, #tpu.memory_space<vmem>>, vector<1x256xf32>
    %4 = vector.broadcast %3 : vector<1x256xf32> to vector<16x256xf32>
    %5 = arith.addf %2, %4 : vector<16x256xf32>
    %c0_5 = arith.constant 0 : index
    %c0_6 = arith.constant 0 : index
    %6 = vector.load %arg3[%c0_5, %c0_6] : memref<16x256xf32, #tpu.memory_space<vmem>>, vector<16x256xf32>
    tpu.vector_store %arg3[%c0_5, %c0_6], %5 {strides = array<i32>} : memref<16x256xf32, #tpu.memory_space<vmem>>, vector<16x256xf32>,
    return
  }
}

module attributes {stable_mosaic.version = 11 : i64} {
  func.func @_proj_kernel(%arg0: memref<16x64xf32, #tpu.memory_space<vmem>>, %arg1: memref<64x256xf32, #tpu.memory_space<vmem>>, %arg2: memref<1x256xf32, #tpu.memory_space<vmem>>, %arg3: memref<16x256xf32, #tpu.memory_space<vmem>>) attributes {dimension_semantics = [], scalar_prefetch = 0 : i64, scratch_operands = 0 : i64, tpu.core_type = #tpu.core_type<tc>} {
    %c0 = arith.constant 0 : index
    %c0_0 = arith.constant 0 : index
    %0 = vector.load %arg0[%c0, %c0_0] : memref<16x64xf32, #tpu.memory_space<vmem>>, vector<16x64xf32>
    %c0_1 = arith.constant 0 : index
    %c0_2 = arith.constant 0 : index
    %1 = vector.load %arg1[%c0_1, %c0_2] : memref<64x256xf32, #tpu.memory_space<vmem>>, vector<64x256xf32>
    %cst = arith.constant dense<0.000000e+00> : vector<16x256xf32>
    %2 = tpu.matmul %0, %1, %cst {dimension_numbers = #tpu.dot_dimension_numbers<[1], [0], [0], [1], [0, 0, 1, 1], [], []>} : vector<16x64xf32>, vector<64x256xf32>, vector<16x256xf32> -> vector<16x256xf32>
    %c0_3 = arith.constant 0 : index
    %c0_4 = arith.constant 0 : index
    %3 = vector.load %arg2[%c0_3, %c0_4] : memref<1x256xf32, #tpu.memory_space<vmem>>, vector<1x256xf32>
    %4 = vector.broadcast %3 : vector<1x256xf32> to vector<16x256xf32>
    %5 = arith.addf %2, %4 : vector<16x256xf32>
    %c0_5 = arith.constant 0 : index
    %c0_6 = arith.constant 0 : index
    %6 = vector.load %arg3[%c0_5, %c0_6] : memref<16x256xf32, #tpu.memory_space<vmem>>, vector<16x256xf32>
    tpu.vector_store %arg3[%c0_5, %c0_6], %5 {strides = array<i32>} : memref<16x256xf32, #tpu.memory_space<vmem>>, vector<16x256xf32>,
    return
  }
}

module attributes {stable_mosaic.version = 11 : i64} {
  func.func @_bilstm_layer_kernel(%arg0: i32, %arg1: memref<8x2x256xf32, #tpu.memory_space<vmem>>, %arg2: memref<32x128xf32, #tpu.memory_space<vmem>>, %arg3: memref<32x128xf32, #tpu.memory_space<vmem>>, %arg4: memref<8x2x64xf32, #tpu.memory_space<vmem>>, %arg5: memref<2x32xf32, #tpu.memory_space<vmem>>, %arg6: memref<2x32xf32, #tpu.memory_space<vmem>>, %arg7: memref<2x32xf32, #tpu.memory_space<vmem>>, %arg8: memref<2x32xf32, #tpu.memory_space<vmem>>) attributes {dimension_semantics = [#tpu.dimension_semantics<arbitrary>], iteration_bounds = array<i64: 8>, scalar_prefetch = 0 : i64, scratch_operands = 4 : i64, tpu.core_type = #tpu.core_type<tc>, window_params = [{pipeline_mode = #tpu.pipeline_mode<synchronous>, transform_indices = @transform_0, window_bounds = array<i64: 8, 2, 256>}, {pipeline_mode = #tpu.pipeline_mode<synchronous>, transform_indices = @transform_1, window_bounds = array<i64: 32, 128>}, {pipeline_mode = #tpu.pipeline_mode<synchronous>, transform_indices = @transform_2, window_bounds = array<i64: 32, 128>}, {pipeline_mode = #tpu.pipeline_mode<synchronous>, transform_indices = @transform_3, window_bounds = array<i64: 8, 2, 64>}]} {
    %c0_i32 = arith.constant 0 : i32
    %0 = arith.cmpi eq, %arg0, %c0_i32 : i32
    %1 = arith.extui %0 : i1 to i32
    %c0_i32_0 = arith.constant 0 : i32
    %2 = arith.cmpi ne, %1, %c0_i32_0 : i32
    scf.if %2 {
      %cst_32 = arith.constant 0.000000e+00 : f32
      %78 = vector.broadcast %cst_32 : f32 to vector<2x32xf32>
      %c0_33 = arith.constant 0 : index
      %c0_34 = arith.constant 0 : index
      %79 = vector.load %arg5[%c0_33, %c0_34] : memref<2x32xf32, #tpu.memory_space<vmem>>, vector<2x32xf32>
      tpu.vector_store %arg5[%c0_33, %c0_34], %78 {strides = array<i32>} : memref<2x32xf32, #tpu.memory_space<vmem>>, vector<2x32xf32>,
      %cst_35 = arith.constant 0.000000e+00 : f32
      %80 = vector.broadcast %cst_35 : f32 to vector<2x32xf32>
      %c0_36 = arith.constant 0 : index
      %c0_37 = arith.constant 0 : index
      %81 = vector.load %arg6[%c0_36, %c0_37] : memref<2x32xf32, #tpu.memory_space<vmem>>, vector<2x32xf32>
      tpu.vector_store %arg6[%c0_36, %c0_37], %80 {strides = array<i32>} : memref<2x32xf32, #tpu.memory_space<vmem>>, vector<2x32xf32>,
      %cst_38 = arith.constant 0.000000e+00 : f32
      %82 = vector.broadcast %cst_38 : f32 to vector<2x32xf32>
      %c0_39 = arith.constant 0 : index
      %c0_40 = arith.constant 0 : index
      %83 = vector.load %arg7[%c0_39, %c0_40] : memref<2x32xf32, #tpu.memory_space<vmem>>, vector<2x32xf32>
      tpu.vector_store %arg7[%c0_39, %c0_40], %82 {strides = array<i32>} : memref<2x32xf32, #tpu.memory_space<vmem>>, vector<2x32xf32>,
      %cst_41 = arith.constant 0.000000e+00 : f32
      %84 = vector.broadcast %cst_41 : f32 to vector<2x32xf32>
      %c0_42 = arith.constant 0 : index
      %c0_43 = arith.constant 0 : index
      %85 = vector.load %arg8[%c0_42, %c0_43] : memref<2x32xf32, #tpu.memory_space<vmem>>, vector<2x32xf32>
      tpu.vector_store %arg8[%c0_42, %c0_43], %84 {strides = array<i32>} : memref<2x32xf32, #tpu.memory_space<vmem>>, vector<2x32xf32>,
    } else {
    }
    %c7_i32 = arith.constant 7 : i32
    %3 = arith.subi %c7_i32, %arg0 : i32
    %4 = arith.index_cast %arg0 : i32 to index
    %c0 = arith.constant 0 : index
    %c0_1 = arith.constant 0 : index
    %5 = vector.load %arg1[%4, %c0, %c0_1] : memref<8x2x256xf32, #tpu.memory_space<vmem>>, vector<1x2x256xf32>
    %6 = vector.shape_cast %5 : vector<1x2x256xf32> to vector<2x256xf32>
    %7 = arith.index_cast %3 : i32 to index
    %c0_2 = arith.constant 0 : index
    %c0_3 = arith.constant 0 : index
    %8 = vector.load %arg1[%7, %c0_2, %c0_3] : memref<8x2x256xf32, #tpu.memory_space<vmem>>, vector<1x2x256xf32>
    %9 = vector.shape_cast %8 : vector<1x2x256xf32> to vector<2x256xf32>
    %10 = vector.extract_strided_slice %6 {offsets = [0, 0], sizes = [2, 128], strides = [1, 1]} : vector<2x256xf32> to vector<2x128xf32>
    %c0_4 = arith.constant 0 : index
    %c0_5 = arith.constant 0 : index
    %11 = vector.load %arg5[%c0_4, %c0_5] : memref<2x32xf32, #tpu.memory_space<vmem>>, vector<2x32xf32>
    %c0_6 = arith.constant 0 : index
    %c0_7 = arith.constant 0 : index
    %12 = vector.load %arg2[%c0_6, %c0_7] : memref<32x128xf32, #tpu.memory_space<vmem>>, vector<32x128xf32>
    %cst = arith.constant dense<0.000000e+00> : vector<2x128xf32>
    %13 = tpu.matmul %11, %12, %cst {dimension_numbers = #tpu.dot_dimension_numbers<[1], [0], [0], [1], [0, 0, 1, 1], [], []>} : vector<2x32xf32>, vector<32x128xf32>, vector<2x128xf32> -> vector<2x128xf32>
    %14 = arith.addf %10, %13 : vector<2x128xf32>
    %15 = tpu.iota {dimensions = array<i32: 1>} : vector<2x128xi32>
    %c64_i32 = arith.constant 64 : i32
    %16 = vector.broadcast %c64_i32 : i32 to vector<2x128xi32>
    %17 = arith.cmpi sge, %15, %16 : vector<2x128xi32>
    %c96_i32 = arith.constant 96 : i32
    %18 = vector.broadcast %c96_i32 : i32 to vector<2x128xi32>
    %19 = arith.cmpi slt, %15, %18 : vector<2x128xi32>
    %20 = arith.andi %17, %19 : vector<2x128xi1>
    %21 = math.tanh %14 : vector<2x128xf32>
    %22 = arith.negf %14 : vector<2x128xf32>
    %23 = math.exp %22 : vector<2x128xf32>
    %cst_8 = arith.constant 1.000000e+00 : f32
    %24 = vector.broadcast %cst_8 : f32 to vector<2x128xf32>
    %25 = arith.addf %24, %23 : vector<2x128xf32>
    %26 = arith.divf %24, %25 : vector<2x128xf32>
    %27 = arith.select %20, %21, %26 : vector<2x128xi1>, vector<2x128xf32>
    %28 = vector.extract_strided_slice %27 {offsets = [0, 0], sizes = [2, 32], strides = [1, 1]} : vector<2x128xf32> to vector<2x32xf32>
    %29 = vector.extract_strided_slice %27 {offsets = [0, 32], sizes = [2, 32], strides = [1, 1]} : vector<2x128xf32> to vector<2x32xf32>
    %30 = vector.extract_strided_slice %27 {offsets = [0, 64], sizes = [2, 32], strides = [1, 1]} : vector<2x128xf32> to vector<2x32xf32>
    %31 = vector.extract_strided_slice %27 {offsets = [0, 96], sizes = [2, 32], strides = [1, 1]} : vector<2x128xf32> to vector<2x32xf32>
    %c0_9 = arith.constant 0 : index
    %c0_10 = arith.constant 0 : index
    %32 = vector.load %arg6[%c0_9, %c0_10] : memref<2x32xf32, #tpu.memory_space<vmem>>, vector<2x32xf32>
    %33 = arith.mulf %29, %32 : vector<2x32xf32>
    %34 = arith.mulf %28, %30 : vector<2x32xf32>
    %35 = arith.addf %33, %34 : vector<2x32xf32>
    %36 = math.tanh %35 : vector<2x32xf32>
    %37 = arith.mulf %31, %36 : vector<2x32xf32>
    %c0_11 = arith.constant 0 : index
    %c0_12 = arith.constant 0 : index
    %38 = vector.load %arg6[%c0_11, %c0_12] : memref<2x32xf32, #tpu.memory_space<vmem>>, vector<2x32xf32>
    tpu.vector_store %arg6[%c0_11, %c0_12], %35 {strides = array<i32>} : memref<2x32xf32, #tpu.memory_space<vmem>>, vector<2x32xf32>,
    %c0_13 = arith.constant 0 : index
    %c0_14 = arith.constant 0 : index
    %39 = vector.load %arg5[%c0_13, %c0_14] : memref<2x32xf32, #tpu.memory_space<vmem>>, vector<2x32xf32>
    tpu.vector_store %arg5[%c0_13, %c0_14], %37 {strides = array<i32>} : memref<2x32xf32, #tpu.memory_space<vmem>>, vector<2x32xf32>,
    %40 = vector.extract_strided_slice %9 {offsets = [0, 128], sizes = [2, 128], strides = [1, 1]} : vector<2x256xf32> to vector<2x128xf32>
    %c0_15 = arith.constant 0 : index
    %c0_16 = arith.constant 0 : index
    %41 = vector.load %arg7[%c0_15, %c0_16] : memref<2x32xf32, #tpu.memory_space<vmem>>, vector<2x32xf32>
    %c0_17 = arith.constant 0 : index
    %c0_18 = arith.constant 0 : index
    %42 = vector.load %arg3[%c0_17, %c0_18] : memref<32x128xf32, #tpu.memory_space<vmem>>, vector<32x128xf32>
    %cst_19 = arith.constant dense<0.000000e+00> : vector<2x128xf32>
    %43 = tpu.matmul %41, %42, %cst_19 {dimension_numbers = #tpu.dot_dimension_numbers<[1], [0], [0], [1], [0, 0, 1, 1], [], []>} : vector<2x32xf32>, vector<32x128xf32>, vector<2x128xf32> -> vector<2x128xf32>
    %44 = arith.addf %40, %43 : vector<2x128xf32>
    %45 = tpu.iota {dimensions = array<i32: 1>} : vector<2x128xi32>
    %c64_i32_20 = arith.constant 64 : i32
    %46 = vector.broadcast %c64_i32_20 : i32 to vector<2x128xi32>
    %47 = arith.cmpi sge, %45, %46 : vector<2x128xi32>
    %c96_i32_21 = arith.constant 96 : i32
    %48 = vector.broadcast %c96_i32_21 : i32 to vector<2x128xi32>
    %49 = arith.cmpi slt, %45, %48 : vector<2x128xi32>
    %50 = arith.andi %47, %49 : vector<2x128xi1>
    %51 = math.tanh %44 : vector<2x128xf32>
    %52 = arith.negf %44 : vector<2x128xf32>
    %53 = math.exp %52 : vector<2x128xf32>
    %cst_22 = arith.constant 1.000000e+00 : f32
    %54 = vector.broadcast %cst_22 : f32 to vector<2x128xf32>
    %55 = arith.addf %54, %53 : vector<2x128xf32>
    %56 = arith.divf %54, %55 : vector<2x128xf32>
    %57 = arith.select %50, %51, %56 : vector<2x128xi1>, vector<2x128xf32>
    %58 = vector.extract_strided_slice %57 {offsets = [0, 0], sizes = [2, 32], strides = [1, 1]} : vector<2x128xf32> to vector<2x32xf32>
    %59 = vector.extract_strided_slice %57 {offsets = [0, 32], sizes = [2, 32], strides = [1, 1]} : vector<2x128xf32> to vector<2x32xf32>
    %60 = vector.extract_strided_slice %57 {offsets = [0, 64], sizes = [2, 32], strides = [1, 1]} : vector<2x128xf32> to vector<2x32xf32>
    %61 = vector.extract_strided_slice %57 {offsets = [0, 96], sizes = [2, 32], strides = [1, 1]} : vector<2x128xf32> to vector<2x32xf32>
    %c0_23 = arith.constant 0 : index
    %c0_24 = arith.constant 0 : index
    %62 = vector.load %arg8[%c0_23, %c0_24] : memref<2x32xf32, #tpu.memory_space<vmem>>, vector<2x32xf32>
    %63 = arith.mulf %59, %62 : vector<2x32xf32>
    %64 = arith.mulf %58, %60 : vector<2x32xf32>
    %65 = arith.addf %63, %64 : vector<2x32xf32>
    %66 = math.tanh %65 : vector<2x32xf32>
    %67 = arith.mulf %61, %66 : vector<2x32xf32>
    %c0_25 = arith.constant 0 : index
    %c0_26 = arith.constant 0 : index
    %68 = vector.load %arg8[%c0_25, %c0_26] : memref<2x32xf32, #tpu.memory_space<vmem>>, vector<2x32xf32>
    tpu.vector_store %arg8[%c0_25, %c0_26], %65 {strides = array<i32>} : memref<2x32xf32, #tpu.memory_space<vmem>>, vector<2x32xf32>,
    %c0_27 = arith.constant 0 : index
    %c0_28 = arith.constant 0 : index
    %69 = vector.load %arg7[%c0_27, %c0_28] : memref<2x32xf32, #tpu.memory_space<vmem>>, vector<2x32xf32>
    tpu.vector_store %arg7[%c0_27, %c0_28], %67 {strides = array<i32>} : memref<2x32xf32, #tpu.memory_space<vmem>>, vector<2x32xf32>,
    %70 = arith.index_cast %arg0 : i32 to index
    %c0_29 = arith.constant 0 : index
    %c0_30 = arith.constant 0 : index
    %71 = vector.load %arg4[%70, %c0_29, %c0_30] : memref<8x2x64xf32, #tpu.memory_space<vmem>>, vector<1x2x32xf32>
    %72 = vector.shape_cast %71 : vector<1x2x32xf32> to vector<2x32xf32>
    %73 = vector.shape_cast %37 : vector<2x32xf32> to vector<1x2x32xf32>
    tpu.vector_store %arg4[%70, %c0_29, %c0_30], %73 {strides = array<i32>} : memref<8x2x64xf32, #tpu.memory_space<vmem>>, vector<1x2x32xf32>,
    %74 = arith.index_cast %3 : i32 to index
    %c0_31 = arith.constant 0 : index
    %c32 = arith.constant 32 : index
    %75 = vector.load %arg4[%74, %c0_31, %c32] : memref<8x2x64xf32, #tpu.memory_space<vmem>>, vector<1x2x32xf32>
    %76 = vector.shape_cast %75 : vector<1x2x32xf32> to vector<2x32xf32>
    %77 = vector.shape_cast %67 : vector<2x32xf32> to vector<1x2x32xf32>
    tpu.vector_store %arg4[%74, %c0_31, %c32], %77 {strides = array<i32>} : memref<8x2x64xf32, #tpu.memory_space<vmem>>, vector<1x2x32xf32>,
    return
  }
  func.func @transform_0(%arg0: i32) -> (i32, i32, i32) {
    %c0_i32 = arith.constant 0 : i32
    %c0_i32_0 = arith.constant 0 : i32
    %c0_i32_1 = arith.constant 0 : i32
    %c0_i32_2 = arith.constant 0 : i32
    return %c0_i32, %c0_i32_0, %c0_i32_1 : i32, i32, i32
  }
  func.func @transform_1(%arg0: i32) -> (i32, i32) {
    %c0_i32 = arith.constant 0 : i32
    %c0_i32_0 = arith.constant 0 : i32
    %c0_i32_1 = arith.constant 0 : i32
    return %c0_i32, %c0_i32_0 : i32, i32
  }
  func.func @transform_2(%arg0: i32) -> (i32, i32) {
    %c0_i32 = arith.constant 0 : i32
    %c0_i32_0 = arith.constant 0 : i32
    %c0_i32_1 = arith.constant 0 : i32
    return %c0_i32, %c0_i32_0 : i32, i32
  }
  func.func @transform_3(%arg0: i32) -> (i32, i32, i32) {
    %c0_i32 = arith.constant 0 : i32
    %c0_i32_0 = arith.constant 0 : i32
    %c0_i32_1 = arith.constant 0 : i32
    %c0_i32_2 = arith.constant 0 : i32
    return %c0_i32, %c0_i32_0, %c0_i32_1 : i32, i32, i32
  }
}

module attributes {stable_mosaic.version = 11 : i64} {
  func.func @_bilstm_layer_head_kernel(%arg0: i32, %arg1: memref<8x2x256xf32, #tpu.memory_space<vmem>>, %arg2: memref<32x128xf32, #tpu.memory_space<vmem>>, %arg3: memref<32x128xf32, #tpu.memory_space<vmem>>, %arg4: memref<1x64xf32, #tpu.memory_space<vmem>>, %arg5: memref<1x1xf32, #tpu.memory_space<vmem>>, %arg6: memref<8x2x1xf32, #tpu.memory_space<vmem>>, %arg7: memref<8x2x64xf32, #tpu.memory_space<vmem>>, %arg8: memref<2x32xf32, #tpu.memory_space<vmem>>, %arg9: memref<2x32xf32, #tpu.memory_space<vmem>>, %arg10: memref<2x32xf32, #tpu.memory_space<vmem>>, %arg11: memref<2x32xf32, #tpu.memory_space<vmem>>) attributes {dimension_semantics = [#tpu.dimension_semantics<arbitrary>], iteration_bounds = array<i64: 8>, scalar_prefetch = 0 : i64, scratch_operands = 5 : i64, tpu.core_type = #tpu.core_type<tc>, window_params = [{pipeline_mode = #tpu.pipeline_mode<synchronous>, transform_indices = @transform_0, window_bounds = array<i64: 8, 2, 256>}, {pipeline_mode = #tpu.pipeline_mode<synchronous>, transform_indices = @transform_1, window_bounds = array<i64: 32, 128>}, {pipeline_mode = #tpu.pipeline_mode<synchronous>, transform_indices = @transform_2, window_bounds = array<i64: 32, 128>}, {pipeline_mode = #tpu.pipeline_mode<synchronous>, transform_indices = @transform_3, window_bounds = array<i64: 1, 64>}, {pipeline_mode = #tpu.pipeline_mode<synchronous>, transform_indices = @transform_4, window_bounds = array<i64: 1, 1>}, {pipeline_mode = #tpu.pipeline_mode<synchronous>, transform_indices = @transform_5, window_bounds = array<i64: 8, 2, 1>}]} {
    %c0_i32 = arith.constant 0 : i32
    %0 = arith.cmpi eq, %arg0, %c0_i32 : i32
    %1 = arith.extui %0 : i1 to i32
    %c0_i32_0 = arith.constant 0 : i32
    %2 = arith.cmpi ne, %1, %c0_i32_0 : i32
    scf.if %2 {
      %cst_34 = arith.constant 0.000000e+00 : f32
      %81 = vector.broadcast %cst_34 : f32 to vector<2x32xf32>
      %c0_35 = arith.constant 0 : index
      %c0_36 = arith.constant 0 : index
      %82 = vector.load %arg8[%c0_35, %c0_36] : memref<2x32xf32, #tpu.memory_space<vmem>>, vector<2x32xf32>
      tpu.vector_store %arg8[%c0_35, %c0_36], %81 {strides = array<i32>} : memref<2x32xf32, #tpu.memory_space<vmem>>, vector<2x32xf32>,
      %cst_37 = arith.constant 0.000000e+00 : f32
      %83 = vector.broadcast %cst_37 : f32 to vector<2x32xf32>
      %c0_38 = arith.constant 0 : index
      %c0_39 = arith.constant 0 : index
      %84 = vector.load %arg9[%c0_38, %c0_39] : memref<2x32xf32, #tpu.memory_space<vmem>>, vector<2x32xf32>
      tpu.vector_store %arg9[%c0_38, %c0_39], %83 {strides = array<i32>} : memref<2x32xf32, #tpu.memory_space<vmem>>, vector<2x32xf32>,
      %cst_40 = arith.constant 0.000000e+00 : f32
      %85 = vector.broadcast %cst_40 : f32 to vector<2x32xf32>
      %c0_41 = arith.constant 0 : index
      %c0_42 = arith.constant 0 : index
      %86 = vector.load %arg10[%c0_41, %c0_42] : memref<2x32xf32, #tpu.memory_space<vmem>>, vector<2x32xf32>
      tpu.vector_store %arg10[%c0_41, %c0_42], %85 {strides = array<i32>} : memref<2x32xf32, #tpu.memory_space<vmem>>, vector<2x32xf32>,
      %cst_43 = arith.constant 0.000000e+00 : f32
      %87 = vector.broadcast %cst_43 : f32 to vector<2x32xf32>
      %c0_44 = arith.constant 0 : index
      %c0_45 = arith.constant 0 : index
      %88 = vector.load %arg11[%c0_44, %c0_45] : memref<2x32xf32, #tpu.memory_space<vmem>>, vector<2x32xf32>
      tpu.vector_store %arg11[%c0_44, %c0_45], %87 {strides = array<i32>} : memref<2x32xf32, #tpu.memory_space<vmem>>, vector<2x32xf32>,
    } else {
    }
    %c7_i32 = arith.constant 7 : i32
    %3 = arith.subi %c7_i32, %arg0 : i32
    %4 = arith.index_cast %arg0 : i32 to index
    %c0 = arith.constant 0 : index
    %c0_1 = arith.constant 0 : index
    %5 = vector.load %arg1[%4, %c0, %c0_1] : memref<8x2x256xf32, #tpu.memory_space<vmem>>, vector<1x2x256xf32>
    %6 = vector.shape_cast %5 : vector<1x2x256xf32> to vector<2x256xf32>
    %7 = arith.index_cast %3 : i32 to index
    %c0_2 = arith.constant 0 : index
    %c0_3 = arith.constant 0 : index
    %8 = vector.load %arg1[%7, %c0_2, %c0_3] : memref<8x2x256xf32, #tpu.memory_space<vmem>>, vector<1x2x256xf32>
    %9 = vector.shape_cast %8 : vector<1x2x256xf32> to vector<2x256xf32>
    %10 = vector.extract_strided_slice %6 {offsets = [0, 0], sizes = [2, 128], strides = [1, 1]} : vector<2x256xf32> to vector<2x128xf32>
    %c0_4 = arith.constant 0 : index
    %c0_5 = arith.constant 0 : index
    %11 = vector.load %arg8[%c0_4, %c0_5] : memref<2x32xf32, #tpu.memory_space<vmem>>, vector<2x32xf32>
    %c0_6 = arith.constant 0 : index
    %c0_7 = arith.constant 0 : index
    %12 = vector.load %arg2[%c0_6, %c0_7] : memref<32x128xf32, #tpu.memory_space<vmem>>, vector<32x128xf32>
    %cst = arith.constant dense<0.000000e+00> : vector<2x128xf32>
    %13 = tpu.matmul %11, %12, %cst {dimension_numbers = #tpu.dot_dimension_numbers<[1], [0], [0], [1], [0, 0, 1, 1], [], []>} : vector<2x32xf32>, vector<32x128xf32>, vector<2x128xf32> -> vector<2x128xf32>
    %14 = arith.addf %10, %13 : vector<2x128xf32>
    %15 = tpu.iota {dimensions = array<i32: 1>} : vector<2x128xi32>
    %c64_i32 = arith.constant 64 : i32
    %16 = vector.broadcast %c64_i32 : i32 to vector<2x128xi32>
    %17 = arith.cmpi sge, %15, %16 : vector<2x128xi32>
    %c96_i32 = arith.constant 96 : i32
    %18 = vector.broadcast %c96_i32 : i32 to vector<2x128xi32>
    %19 = arith.cmpi slt, %15, %18 : vector<2x128xi32>
    %20 = arith.andi %17, %19 : vector<2x128xi1>
    %21 = math.tanh %14 : vector<2x128xf32>
    %22 = arith.negf %14 : vector<2x128xf32>
    %23 = math.exp %22 : vector<2x128xf32>
    %cst_8 = arith.constant 1.000000e+00 : f32
    %24 = vector.broadcast %cst_8 : f32 to vector<2x128xf32>
    %25 = arith.addf %24, %23 : vector<2x128xf32>
    %26 = arith.divf %24, %25 : vector<2x128xf32>
    %27 = arith.select %20, %21, %26 : vector<2x128xi1>, vector<2x128xf32>
    %28 = vector.extract_strided_slice %27 {offsets = [0, 0], sizes = [2, 32], strides = [1, 1]} : vector<2x128xf32> to vector<2x32xf32>
    %29 = vector.extract_strided_slice %27 {offsets = [0, 32], sizes = [2, 32], strides = [1, 1]} : vector<2x128xf32> to vector<2x32xf32>
    %30 = vector.extract_strided_slice %27 {offsets = [0, 64], sizes = [2, 32], strides = [1, 1]} : vector<2x128xf32> to vector<2x32xf32>
    %31 = vector.extract_strided_slice %27 {offsets = [0, 96], sizes = [2, 32], strides = [1, 1]} : vector<2x128xf32> to vector<2x32xf32>
    %c0_9 = arith.constant 0 : index
    %c0_10 = arith.constant 0 : index
    %32 = vector.load %arg9[%c0_9, %c0_10] : memref<2x32xf32, #tpu.memory_space<vmem>>, vector<2x32xf32>
    %33 = arith.mulf %29, %32 : vector<2x32xf32>
    %34 = arith.mulf %28, %30 : vector<2x32xf32>
    %35 = arith.addf %33, %34 : vector<2x32xf32>
    %36 = math.tanh %35 : vector<2x32xf32>
    %37 = arith.mulf %31, %36 : vector<2x32xf32>
    %c0_11 = arith.constant 0 : index
    %c0_12 = arith.constant 0 : index
    %38 = vector.load %arg9[%c0_11, %c0_12] : memref<2x32xf32, #tpu.memory_space<vmem>>, vector<2x32xf32>
    tpu.vector_store %arg9[%c0_11, %c0_12], %35 {strides = array<i32>} : memref<2x32xf32, #tpu.memory_space<vmem>>, vector<2x32xf32>,
    %c0_13 = arith.constant 0 : index
    %c0_14 = arith.constant 0 : index
    %39 = vector.load %arg8[%c0_13, %c0_14] : memref<2x32xf32, #tpu.memory_space<vmem>>, vector<2x32xf32>
    tpu.vector_store %arg8[%c0_13, %c0_14], %37 {strides = array<i32>} : memref<2x32xf32, #tpu.memory_space<vmem>>, vector<2x32xf32>,
    %40 = vector.extract_strided_slice %9 {offsets = [0, 128], sizes = [2, 128], strides = [1, 1]} : vector<2x256xf32> to vector<2x128xf32>
    %c0_15 = arith.constant 0 : index
    %c0_16 = arith.constant 0 : index
    %41 = vector.load %arg10[%c0_15, %c0_16] : memref<2x32xf32, #tpu.memory_space<vmem>>, vector<2x32xf32>
    %c0_17 = arith.constant 0 : index
    %c0_18 = arith.constant 0 : index
    %42 = vector.load %arg3[%c0_17, %c0_18] : memref<32x128xf32, #tpu.memory_space<vmem>>, vector<32x128xf32>
    %cst_19 = arith.constant dense<0.000000e+00> : vector<2x128xf32>
    %43 = tpu.matmul %41, %42, %cst_19 {dimension_numbers = #tpu.dot_dimension_numbers<[1], [0], [0], [1], [0, 0, 1, 1], [], []>} : vector<2x32xf32>, vector<32x128xf32>, vector<2x128xf32> -> vector<2x128xf32>
    %44 = arith.addf %40, %43 : vector<2x128xf32>
    %45 = tpu.iota {dimensions = array<i32: 1>} : vector<2x128xi32>
    %c64_i32_20 = arith.constant 64 : i32
    %46 = vector.broadcast %c64_i32_20 : i32 to vector<2x128xi32>
    %47 = arith.cmpi sge, %45, %46 : vector<2x128xi32>
    %c96_i32_21 = arith.constant 96 : i32
    %48 = vector.broadcast %c96_i32_21 : i32 to vector<2x128xi32>
    %49 = arith.cmpi slt, %45, %48 : vector<2x128xi32>
    %50 = arith.andi %47, %49 : vector<2x128xi1>
    %51 = math.tanh %44 : vector<2x128xf32>
    %52 = arith.negf %44 : vector<2x128xf32>
    %53 = math.exp %52 : vector<2x128xf32>
    %cst_22 = arith.constant 1.000000e+00 : f32
    %54 = vector.broadcast %cst_22 : f32 to vector<2x128xf32>
    %55 = arith.addf %54, %53 : vector<2x128xf32>
    %56 = arith.divf %54, %55 : vector<2x128xf32>
    %57 = arith.select %50, %51, %56 : vector<2x128xi1>, vector<2x128xf32>
    %58 = vector.extract_strided_slice %57 {offsets = [0, 0], sizes = [2, 32], strides = [1, 1]} : vector<2x128xf32> to vector<2x32xf32>
    %59 = vector.extract_strided_slice %57 {offsets = [0, 32], sizes = [2, 32], strides = [1, 1]} : vector<2x128xf32> to vector<2x32xf32>
    %60 = vector.extract_strided_slice %57 {offsets = [0, 64], sizes = [2, 32], strides = [1, 1]} : vector<2x128xf32> to vector<2x32xf32>
    %61 = vector.extract_strided_slice %57 {offsets = [0, 96], sizes = [2, 32], strides = [1, 1]} : vector<2x128xf32> to vector<2x32xf32>
    %c0_23 = arith.constant 0 : index
    %c0_24 = arith.constant 0 : index
    %62 = vector.load %arg11[%c0_23, %c0_24] : memref<2x32xf32, #tpu.memory_space<vmem>>, vector<2x32xf32>
    %63 = arith.mulf %59, %62 : vector<2x32xf32>
    %64 = arith.mulf %58, %60 : vector<2x32xf32>
    %65 = arith.addf %63, %64 : vector<2x32xf32>
    %66 = math.tanh %65 : vector<2x32xf32>
    %67 = arith.mulf %61, %66 : vector<2x32xf32>
    %c0_25 = arith.constant 0 : index
    %c0_26 = arith.constant 0 : index
    %68 = vector.load %arg11[%c0_25, %c0_26] : memref<2x32xf32, #tpu.memory_space<vmem>>, vector<2x32xf32>
    tpu.vector_store %arg11[%c0_25, %c0_26], %65 {strides = array<i32>} : memref<2x32xf32, #tpu.memory_space<vmem>>, vector<2x32xf32>,
    %c0_27 = arith.constant 0 : index
    %c0_28 = arith.constant 0 : index
    %69 = vector.load %arg10[%c0_27, %c0_28] : memref<2x32xf32, #tpu.memory_space<vmem>>, vector<2x32xf32>
    tpu.vector_store %arg10[%c0_27, %c0_28], %67 {strides = array<i32>} : memref<2x32xf32, #tpu.memory_space<vmem>>, vector<2x32xf32>,
    %70 = arith.index_cast %arg0 : i32 to index
    %c0_29 = arith.constant 0 : index
    %c0_30 = arith.constant 0 : index
    %71 = vector.load %arg7[%70, %c0_29, %c0_30] : memref<8x2x64xf32, #tpu.memory_space<vmem>>, vector<1x2x32xf32>
    %72 = vector.shape_cast %71 : vector<1x2x32xf32> to vector<2x32xf32>
    %73 = vector.shape_cast %37 : vector<2x32xf32> to vector<1x2x32xf32>
    tpu.vector_store %arg7[%70, %c0_29, %c0_30], %73 {strides = array<i32>} : memref<8x2x64xf32, #tpu.memory_space<vmem>>, vector<1x2x32xf32>,
    %74 = arith.index_cast %3 : i32 to index
    %c0_31 = arith.constant 0 : index
    %c32 = arith.constant 32 : index
    %75 = vector.load %arg7[%74, %c0_31, %c32] : memref<8x2x64xf32, #tpu.memory_space<vmem>>, vector<1x2x32xf32>
    %76 = vector.shape_cast %75 : vector<1x2x32xf32> to vector<2x32xf32>
    %77 = vector.shape_cast %67 : vector<2x32xf32> to vector<1x2x32xf32>
    tpu.vector_store %arg7[%74, %c0_31, %c32], %77 {strides = array<i32>} : memref<8x2x64xf32, #tpu.memory_space<vmem>>, vector<1x2x32xf32>,
    %c7_i32_32 = arith.constant 7 : i32
    %78 = arith.cmpi eq, %arg0, %c7_i32_32 : i32
    %79 = arith.extui %78 : i1 to i32
    %c0_i32_33 = arith.constant 0 : i32
    %80 = arith.cmpi ne, %79, %c0_i32_33 : i32
    scf.if %80 {
      %c0_34 = arith.constant 0 : index
      %c0_35 = arith.constant 0 : index
      %c0_36 = arith.constant 0 : index
      %81 = vector.load %arg7[%c0_34, %c0_35, %c0_36] : memref<8x2x64xf32, #tpu.memory_space<vmem>>, vector<8x2x64xf32>
      %c0_37 = arith.constant 0 : index
      %c0_38 = arith.constant 0 : index
      %82 = vector.load %arg4[%c0_37, %c0_38] : memref<1x64xf32, #tpu.memory_space<vmem>>, vector<1x64xf32>
      %83 = vector.shape_cast %82 : vector<1x64xf32> to vector<1x1x64xf32>
      %84 = vector.broadcast %83 : vector<1x1x64xf32> to vector<8x2x64xf32>
      %85 = arith.mulf %81, %84 : vector<8x2x64xf32>
      %cst_39 = arith.constant dense<0.000000e+00> : vector<8x2xf32>
      %86 = vector.multi_reduction <add>, %85, %cst_39 [2] : vector<8x2x64xf32> to vector<8x2xf32>
      %87 = vector.shape_cast %86 : vector<8x2xf32> to vector<8x2x1xf32>
      %c0_40 = arith.constant 0 : index
      %c0_41 = arith.constant 0 : index
      %88 = vector.load %arg5[%c0_40, %c0_41] : memref<1x1xf32, #tpu.memory_space<vmem>>, vector<1x1xf32>
      %89 = vector.shape_cast %88 : vector<1x1xf32> to vector<1x1x1xf32>
      %90 = vector.broadcast %89 : vector<1x1x1xf32> to vector<8x2x1xf32>
      %91 = arith.addf %87, %90 : vector<8x2x1xf32>
      %92 = arith.negf %91 : vector<8x2x1xf32>
      %93 = math.exp %92 : vector<8x2x1xf32>
      %cst_42 = arith.constant 1.000000e+00 : f32
      %94 = vector.broadcast %cst_42 : f32 to vector<8x2x1xf32>
      %95 = arith.addf %94, %93 : vector<8x2x1xf32>
      %96 = arith.divf %94, %95 : vector<8x2x1xf32>
      %c0_43 = arith.constant 0 : index
      %c0_44 = arith.constant 0 : index
      %c0_45 = arith.constant 0 : index
      %97 = vector.load %arg6[%c0_43, %c0_44, %c0_45] : memref<8x2x1xf32, #tpu.memory_space<vmem>>, vector<8x2x1xf32>
      tpu.vector_store %arg6[%c0_43, %c0_44, %c0_45], %96 {strides = array<i32>} : memref<8x2x1xf32, #tpu.memory_space<vmem>>, vector<8x2x1xf32>,
    } else {
    }
    return
  }
  func.func @transform_0(%arg0: i32) -> (i32, i32, i32) {
    %c0_i32 = arith.constant 0 : i32
    %c0_i32_0 = arith.constant 0 : i32
    %c0_i32_1 = arith.constant 0 : i32
    %c0_i32_2 = arith.constant 0 : i32
    return %c0_i32, %c0_i32_0, %c0_i32_1 : i32, i32, i32
  }
  func.func @transform_1(%arg0: i32) -> (i32, i32) {
    %c0_i32 = arith.constant 0 : i32
    %c0_i32_0 = arith.constant 0 : i32
    %c0_i32_1 = arith.constant 0 : i32
    return %c0_i32, %c0_i32_0 : i32, i32
  }
  func.func @transform_2(%arg0: i32) -> (i32, i32) {
    %c0_i32 = arith.constant 0 : i32
    %c0_i32_0 = arith.constant 0 : i32
    %c0_i32_1 = arith.constant 0 : i32
    return %c0_i32, %c0_i32_0 : i32, i32
  }
  func.func @transform_3(%arg0: i32) -> (i32, i32) {
    %c0_i32 = arith.constant 0 : i32
    %c0_i32_0 = arith.constant 0 : i32
    %c0_i32_1 = arith.constant 0 : i32
    return %c0_i32, %c0_i32_0 : i32, i32
  }
  func.func @transform_4(%arg0: i32) -> (i32, i32) {
    %c0_i32 = arith.constant 0 : i32
    %c0_i32_0 = arith.constant 0 : i32
    %c0_i32_1 = arith.constant 0 : i32
    return %c0_i32, %c0_i32_0 : i32, i32
  }
  func.func @transform_5(%arg0: i32) -> (i32, i32, i32) {
    %c0_i32 = arith.constant 0 : i32
    %c0_i32_0 = arith.constant 0 : i32
    %c0_i32_1 = arith.constant 0 : i32
    %c0_i32_2 = arith.constant 0 : i32
    return %c0_i32, %c0_i32_0, %c0_i32_1 : i32, i32, i32
  }
}

</mosaic_0001>

<llo_original>
// kernel: lstm_classifier_bidirectional_forward.6
$region0: #{lstm_classifier_bidirectional_forward.6}
  #allocation0 [shape = 'u32[]', space=smem, size = 0x4, offset = 0x4, fixed_abs, tag = 'smem constant byte address 0x4 - core index']
  #allocation1 [shape = 'u32[72,128]{1,0:T(1,128)}', space=vmem, size = 0x9000, scoped, tag = 'internal scratch']
  %s0 = inlined_call_operand.vmem [shape: f32[16,64], index: 0, kind: input, shape index: {}]
  %s1 = inlined_call_operand.vmem [shape: f32[64,256], index: 1, kind: input, shape index: {}]
  %s2 = inlined_call_operand.vmem [shape: f32[1,256], index: 2, kind: input, shape index: {}]
  %s3 = inlined_call_operand.vmem [shape: f32[16,256], index: 3, kind: output, shape index: {}]
  %s4 = sld [smem:[#allocation0]]
  $region22: #{lstm_classifier_bidirectional_forward.6} parent=0
    _
  %s6 = ssub.s32 1, %s4
  %s7 = scalar_select 0, %s6, %s4
  // Predicated region
  $region2: #{lstm_classifier_bidirectional_forward.6} parent=0 // pred_check
    _
  $region3: #{lstm_classifier_bidirectional_forward.6} parent=0 // pred_check_branch
    %9 = sbr.rel (0) target = $region5
  $region4: #{lstm_classifier_bidirectional_forward.6} parent=0 // pred_region
    _
  $region5: #{lstm_classifier_bidirectional_forward.6} parent=0 // pred_fallthru
    _
  // Predicated region
  $region6: #{lstm_classifier_bidirectional_forward.6} parent=0 // pred_check
    _
  $region7: #{lstm_classifier_bidirectional_forward.6} parent=0 // pred_check_branch
    %11 = sbr.rel (0) target = $region9
  $region8: #{lstm_classifier_bidirectional_forward.6} parent=0 // pred_region
    _
  $region9: #{lstm_classifier_bidirectional_forward.6} parent=0 // pred_fallthru
    _
  // Predicated region
  $region10: #{lstm_classifier_bidirectional_forward.6} parent=0 // pred_check
    _
  $region11: #{lstm_classifier_bidirectional_forward.6} parent=0 // pred_check_branch
    %13 = sbr.rel (0) target = $region13
  $region12: #{lstm_classifier_bidirectional_forward.6} parent=0 // pred_region
    _
  $region13: #{lstm_classifier_bidirectional_forward.6} parent=0 // pred_fallthru
    _
  %v14 = vld [vmem:[%s0] sm:$0xff]
  %v15 = vld [vmem:[%s0 + $0x8] sm:$0xff]
  %v16 = vld [vmem:[%s1] sm:$0xff]
  %v17 = vld [vmem:[%s1 + $0x8] sm:$0xff]
  %v18 = vld [vmem:[%s1 + $0x10] sm:$0xff]
  %v19 = vld [vmem:[%s1 + $0x18] sm:$0xff]
  %v20 = vld [vmem:[%s1 + $0x20] sm:$0xff]
  %v21 = vld [vmem:[%s1 + $0x28] sm:$0xff]
  %v22 = vld [vmem:[%s1 + $0x30] sm:$0xff]
  %v23 = vld [vmem:[%s1 + $0x38] sm:$0xff]
  %v24 = vld [vmem:[%s1 + $0x40] sm:$0xff]
  %v25 = vld [vmem:[%s1 + $0x48] sm:$0xff]
  %v26 = vld [vmem:[%s1 + $0x50] sm:$0xff]
  %v27 = vld [vmem:[%s1 + $0x58] sm:$0xff]
  %v28 = vld [vmem:[%s1 + $0x60] sm:$0xff]
  %v29 = vld [vmem:[%s1 + $0x68] sm:$0xff]
  %v30 = vld [vmem:[%s1 + $0x70] sm:$0xff]
  %v31 = vld [vmem:[%s1 + $0x78] sm:$0xff]
  %v32 = vld [vmem:[%s2] sm:$0x3]
  %v34 = vperm.slane %v32, 0
  %v35 = vperm.slane %v32, 1
  %vm38 = vcmask 523264
  %v40 = vsel %vm38, %v14, 0
  %v43 = vsel %vm38, %v15, 0
  %45 = vmatpush.msra.mxu0 0.0
  %46 = vmatpush.msra.mxu0 0.0
  %47 = vmatpush.msra.mxu0 0.0
  %48 = vmatpush.msra.mxu0 0.0
  %49 = vmatpush.msra.mxu0 0.0
  %50 = vmatpush.msra.mxu0 0.0
  %51 = vmatpush.msra.mxu0 0.0
  %52 = vmatpush.msra.mxu0 0.0
  %53 = vmatpush.msra.mxu0 %v30
  %54 = vmatpush.msra.mxu0 %v28
  %55 = vmatpush.msra.mxu0 %v26
  %56 = vmatpush.msra.mxu0 %v24
  %57 = vmatpush.msra.mxu0 %v22
  %58 = vmatpush.msra.mxu0 %v20
  %59 = vmatpush.msra.mxu0 %v18
  %60 = vmatpush.msra.mxu0 %v16
  %61 = vmatmul.f32.gmra.mxu0 %v40
  %v62 = vpop.f32.mrf.mxu0
  %v63 = vadd.f32 %v34, %v62
  %64 = vmatmul.f32.gmra.mxu0 %v43
  %v65 = vpop.f32.mrf.mxu0
  %v66 = vadd.f32 %v34, %v65
  %67 = vdwg.mxu0
  %68 = vmatpush.msra.mxu0 0.0
  %69 = vmatpush.msra.mxu0 0.0
  %70 = vmatpush.msra.mxu0 0.0
  %71 = vmatpush.msra.mxu0 0.0
  %72 = vmatpush.msra.mxu0 0.0
  %73 = vmatpush.msra.mxu0 0.0
  %74 = vmatpush.msra.mxu0 0.0
  %75 = vmatpush.msra.mxu0 0.0
  %76 = vmatpush.msra.mxu0 %v31
  %77 = vmatpush.msra.mxu0 %v29
  %78 = vmatpush.msra.mxu0 %v27
  %79 = vmatpush.msra.mxu0 %v25
  %80 = vmatpush.msra.mxu0 %v23
  %81 = vmatpush.msra.mxu0 %v21
  %82 = vmatpush.msra.mxu0 %v19
  %83 = vmatpush.msra.mxu0 %v17
  %84 = vmatmul.f32.gmra.mxu0 %v40
  %v85 = vpop.f32.mrf.mxu0
  %v86 = vadd.f32 %v35, %v85
  %87 = vmatmul.f32.gmra.mxu0 %v43
  %v88 = vpop.f32.mrf.mxu0
  %v89 = vadd.f32 %v35, %v88
  %90 = vdwg.mxu0
  %91 = vst [vmem:[%s3] sm:$0xff] %v63
  %92 = vst [vmem:[%s3 + $0x8] sm:$0xff] %v86
  %93 = vst [vmem:[%s3 + $0x10] sm:$0xff] %v66
  %94 = vst [vmem:[%s3 + $0x18] sm:$0xff] %v89
  // Predicated region
  $region14: #{lstm_classifier_bidirectional_forward.6} parent=0 // pred_check
    _
  $region15: #{lstm_classifier_bidirectional_forward.6} parent=0 // pred_check_branch
    %96 = sbr.rel (0) target = $region17
  $region16: #{lstm_classifier_bidirectional_forward.6} parent=0 // pred_region
    _
  $region17: #{lstm_classifier_bidirectional_forward.6} parent=0 // pred_fallthru
    _
  // Predicated region
  $region18: #{lstm_classifier_bidirectional_forward.6} parent=0 // pred_check
    _
  $region19: #{lstm_classifier_bidirectional_forward.6} parent=0 // pred_check_branch
    %98 = sbr.rel (0) target = $region21
  $region20: #{lstm_classifier_bidirectional_forward.6} parent=0 // pred_region
    _
  $region21: #{lstm_classifier_bidirectional_forward.6} parent=0 // pred_fallthru
    _

// kernel: lstm_classifier_bidirectional_forward.4
$region0: #{lstm_classifier_bidirectional_forward.4}
  #allocation0 [shape = 'u32[]', space=smem, size = 0x4, offset = 0x4, fixed_abs, tag = 'smem constant byte address 0x4 - core index']
  #allocation1 [shape = 'u32[72,128]{1,0:T(1,128)}', space=vmem, size = 0x9000, scoped, tag = 'internal scratch']
  %s0 = inlined_call_operand.vmem [shape: f32[16,16], index: 0, kind: input, shape index: {}]
  %s1 = inlined_call_operand.vmem [shape: f32[16,256], index: 1, kind: input, shape index: {}]
  %s2 = inlined_call_operand.vmem [shape: f32[1,256], index: 2, kind: input, shape index: {}]
  %s3 = inlined_call_operand.vmem [shape: f32[16,256], index: 3, kind: output, shape index: {}]
  %s4 = sld [smem:[#allocation0]]
  $region22: #{lstm_classifier_bidirectional_forward.4} parent=0
    _
  %s6 = ssub.s32 1, %s4
  %s7 = scalar_select 0, %s6, %s4
  // Predicated region
  $region2: #{lstm_classifier_bidirectional_forward.4} parent=0 // pred_check
    _
  $region3: #{lstm_classifier_bidirectional_forward.4} parent=0 // pred_check_branch
    %9 = sbr.rel (0) target = $region5
  $region4: #{lstm_classifier_bidirectional_forward.4} parent=0 // pred_region
    _
  $region5: #{lstm_classifier_bidirectional_forward.4} parent=0 // pred_fallthru
    _
  // Predicated region
  $region6: #{lstm_classifier_bidirectional_forward.4} parent=0 // pred_check
    _
  $region7: #{lstm_classifier_bidirectional_forward.4} parent=0 // pred_check_branch
    %11 = sbr.rel (0) target = $region9
  $region8: #{lstm_classifier_bidirectional_forward.4} parent=0 // pred_region
    _
  $region9: #{lstm_classifier_bidirectional_forward.4} parent=0 // pred_fallthru
    _
  // Predicated region
  $region10: #{lstm_classifier_bidirectional_forward.4} parent=0 // pred_check
    _
  $region11: #{lstm_classifier_bidirectional_forward.4} parent=0 // pred_check_branch
    %13 = sbr.rel (0) target = $region13
  $region12: #{lstm_classifier_bidirectional_forward.4} parent=0 // pred_region
    _
  $region13: #{lstm_classifier_bidirectional_forward.4} parent=0 // pred_fallthru
    _
  %v14 = vld [vmem:[%s0] sm:$0xff]
  %v15 = vld [vmem:[%s0 + $0x8] sm:$0xff]
  %v16 = vld [vmem:[%s1] sm:$0xff]
  %v17 = vld [vmem:[%s1 + $0x8] sm:$0xff]
  %v18 = vld [vmem:[%s1 + $0x10] sm:$0xff]
  %v19 = vld [vmem:[%s1 + $0x18] sm:$0xff]
  %v20 = vld [vmem:[%s2] sm:$0x3]
  %v22 = vperm.slane %v20, 0
  %v23 = vperm.slane %v20, 1
  %vm26 = vcmask 130048
  %v28 = vsel %vm26, %v14, 0
  %v31 = vsel %vm26, %v15, 0
  %33 = vmatpush.msra.mxu0 0.0
  %34 = vmatpush.msra.mxu0 0.0
  %35 = vmatpush.msra.mxu0 0.0
  %36 = vmatpush.msra.mxu0 0.0
  %37 = vmatpush.msra.mxu0 0.0
  %38 = vmatpush.msra.mxu0 0.0
  %39 = vmatpush.msra.mxu0 0.0
  %40 = vmatpush.msra.mxu0 0.0
  %41 = vmatpush.msra.mxu0 0.0
  %42 = vmatpush.msra.mxu0 0.0
  %43 = vmatpush.msra.mxu0 0.0
  %44 = vmatpush.msra.mxu0 0.0
  %45 = vmatpush.msra.mxu0 0.0
  %46 = vmatpush.msra.mxu0 0.0
  %47 = vmatpush.msra.mxu0 %v18
  %48 = vmatpush.msra.mxu0 %v16
  %49 = vmatmul.f32.gmra.mxu0 %v28
  %v50 = vpop.f32.mrf.mxu0
  %v51 = vadd.f32 %v22, %v50
  %52 = vmatmul.f32.gmra.mxu0 %v31
  %v53 = vpop.f32.mrf.mxu0
  %v54 = vadd.f32 %v22, %v53
  %55 = vdwg.mxu0
  %56 = vmatpush.msra.mxu0 0.0
  %57 = vmatpush.msra.mxu0 0.0
  %58 = vmatpush.msra.mxu0 0.0
  %59 = vmatpush.msra.mxu0 0.0
  %60 = vmatpush.msra.mxu0 0.0
  %61 = vmatpush.msra.mxu0 0.0
  %62 = vmatpush.msra.mxu0 0.0
  %63 = vmatpush.msra.mxu0 0.0
  %64 = vmatpush.msra.mxu0 0.0
  %65 = vmatpush.msra.mxu0 0.0
  %66 = vmatpush.msra.mxu0 0.0
  %67 = vmatpush.msra.mxu0 0.0
  %68 = vmatpush.msra.mxu0 0.0
  %69 = vmatpush.msra.mxu0 0.0
  %70 = vmatpush.msra.mxu0 %v19
  %71 = vmatpush.msra.mxu0 %v17
  %72 = vmatmul.f32.gmra.mxu0 %v28
  %v73 = vpop.f32.mrf.mxu0
  %v74 = vadd.f32 %v23, %v73
  %75 = vmatmul.f32.gmra.mxu0 %v31
  %v76 = vpop.f32.mrf.mxu0
  %v77 = vadd.f32 %v23, %v76
  %78 = vdwg.mxu0
  %79 = vst [vmem:[%s3] sm:$0xff] %v51
  %80 = vst [vmem:[%s3 + $0x8] sm:$0xff] %v74
  %81 = vst [vmem:[%s3 + $0x10] sm:$0xff] %v54
  %82 = vst [vmem:[%s3 + $0x18] sm:$0xff] %v77
  // Predicated region
  $region14: #{lstm_classifier_bidirectional_forward.4} parent=0 // pred_check
    _
  $region15: #{lstm_classifier_bidirectional_forward.4} parent=0 // pred_check_branch
    %84 = sbr.rel (0) target = $region17
  $region16: #{lstm_classifier_bidirectional_forward.4} parent=0 // pred_region
    _
  $region17: #{lstm_classifier_bidirectional_forward.4} parent=0 // pred_fallthru
    _
  // Predicated region
  $region18: #{lstm_classifier_bidirectional_forward.4} parent=0 // pred_check
    _
  $region19: #{lstm_classifier_bidirectional_forward.4} parent=0 // pred_check_branch
    %86 = sbr.rel (0) target = $region21
  $region20: #{lstm_classifier_bidirectional_forward.4} parent=0 // pred_region
    _
  $region21: #{lstm_classifier_bidirectional_forward.4} parent=0 // pred_fallthru
    _

// kernel: lstm_classifier_bidirectional_forward.5
$region0: #{lstm_classifier_bidirectional_forward.5}
  #allocation0 [shape = 'u32[]', space=smem, size = 0x4, offset = 0x4, fixed_abs, tag = 'smem constant byte address 0x4 - core index']
  #allocation1 [shape = 'u32[72,128]{1,0:T(1,128)}', space=vmem, size = 0x9000, scoped, tag = 'internal scratch']
  #allocation2 [shape = 'f32[2,32]{1,0:T(2,128)}', space=vmem, size = 0x400, scoped, tag = 'scratch operand']
  #allocation3 [shape = 'f32[2,32]{1,0:T(2,128)}', space=vmem, size = 0x400, scoped, tag = 'scratch operand']
  #allocation4 [shape = 'f32[2,32]{1,0:T(2,128)}', space=vmem, size = 0x400, scoped, tag = 'scratch operand']
  #allocation5 [shape = 'f32[2,32]{1,0:T(2,128)}', space=vmem, size = 0x400, scoped, tag = 'scratch operand']
  %s0 = inlined_call_operand.vmem [shape: f32[8,2,256], index: 0, kind: input, shape index: {}]
  %s1 = inlined_call_operand.vmem [shape: f32[32,128], index: 1, kind: input, shape index: {}]
  %s2 = inlined_call_operand.hbm [shape: f32[32,128], index: 2, kind: input, shape index: {}]
  %s3 = inlined_call_operand.vmem [shape: f32[8,2,64], index: 3, kind: output, shape index: {}]
  %s4 = sld [smem:[#allocation0]]
  $region53: #{lstm_classifier_bidirectional_forward.5} parent=0
    _
  %s6 = ssub.s32 1, %s4
  %s7 = scalar_select 0, %s6, %s4
  $region1: #{lstm_classifier_bidirectional_forward.5} parent=0
    #allocation6 [shape = 'u8[16384]{0}', space=vmem, size = 0x4000, scoped, tag = 'input window, operand 2, single buffered']
    #allocation7 [shape = 's32[2]{0}', space=sflag, size = 0x8, scoped, tag = 'scoped memory for lstm_classifier_bidirectional_forward.5']
    %8 = vsyncpa [#allocation7], 0
    loop: start=0, step=1, limit=10
    $region2: #{lstm_classifier_bidirectional_forward.5} parent=1 // loop_pre_header
      _
    $region3: #{lstm_classifier_bidirectional_forward.5} parent=1 // loop_header
      %s10 = sphi 0, %s14
      %p11 = scmp.ge.s32.totalorder %s10, 10
      %s18 = sphi 0, %s18
      %s20 = sphi 0, %s18
      %s21 = sphi 0, %s20
      %s35 = sphi 0, %s21
      %s39 = sphi 0, %s39
      %s41 = sphi 0, %s39
      %s42 = sphi 0, %s41
      %s56 = sphi 0, %s42
      %s60 = sphi 0, %s60
      %s62 = sphi 0, %s60
      %s63 = sphi 0, %s62
      %s77 = sphi 0, %s63
      %s81 = sphi 0, %s81
      %s83 = sphi 0, %s81
      %s84 = sphi 0, %s83
      %s98 = sphi 0, %s84
    $region4: #{lstm_classifier_bidirectional_forward.5} parent=1 // loop_header_branch
      %13 = sbr.rel (%p11) target = $region8
    $region5: #{lstm_classifier_bidirectional_forward.5} parent=1 // loop_body
      %s15 = ssub.s32 %s10, 1
      %s16 = ssub.s32 %s10, 2
      %s17 = sadd.s32 %s10, 1
      %s19 = sadd.s32 %s18, 1
      %p22 = scmp.eq.s32.totalorder %s10, 7
      %p23 = scmp.ne.s32.totalorder %s18, %s20
      %p24 = scmp.eq.s32.totalorder %s10, 0
      %p25 = por %p23, %p24
      %p26 = scmp.ne.s32.totalorder %s18, %s20
      %p27 = scmp.eq.s32.totalorder %s15, 7
      %p28 = por %p26, %p27
      %p29 = scmp.ne.s32.totalorder %s20, %s21
      %p30 = scmp.eq.s32.totalorder %s15, 0
      %p31 = por %p29, %p30
      %p32 = scmp.ne.s32.totalorder %s20, %s21
      %p33 = scmp.eq.s32.totalorder %s16, 7
      %p34 = por %p32, %p33
      %p36 = scmp.ne.s32.totalorder %s21, %s35
      %p37 = scmp.eq.s32.totalorder %s16, 0
      %p38 = por %p36, %p37
      %s40 = sadd.s32 %s39, 1
      %p43 = scmp.eq.s32.totalorder %s10, 7
      %p44 = scmp.ne.s32.totalorder %s39, %s41
      %p45 = scmp.eq.s32.totalorder %s10, 0
      %p46 = por %p44, %p45
      %p47 = scmp.ne.s32.totalorder %s39, %s41
      %p48 = scmp.eq.s32.totalorder %s15, 7
      %p49 = por %p47, %p48
      %p50 = scmp.ne.s32.totalorder %s41, %s42
      %p51 = scmp.eq.s32.totalorder %s15, 0
      %p52 = por %p50, %p51
      %p53 = scmp.ne.s32.totalorder %s41, %s42
      %p54 = scmp.eq.s32.totalorder %s16, 7
      %p55 = por %p53, %p54
      %p57 = scmp.ne.s32.totalorder %s42, %s56
      %p58 = scmp.eq.s32.totalorder %s16, 0
      %p59 = por %p57, %p58
      %s61 = sadd.s32 %s60, 1
      %p64 = scmp.eq.s32.totalorder %s10, 7
      %p65 = scmp.ne.s32.totalorder %s60, %s62
      %p66 = scmp.eq.s32.totalorder %s10, 0
      %p67 = por %p65, %p66
      %p68 = scmp.ne.s32.totalorder %s60, %s62
      %p69 = scmp.eq.s32.totalorder %s15, 7
      %p70 = por %p68, %p69
      %p71 = scmp.ne.s32.totalorder %s62, %s63
      %p72 = scmp.eq.s32.totalorder %s15, 0
      %p73 = por %p71, %p72
      %p74 = scmp.ne.s32.totalorder %s62, %s63
      %p75 = scmp.eq.s32.totalorder %s16, 7
      %p76 = por %p74, %p75
      %p78 = scmp.ne.s32.totalorder %s63, %s77
      %p79 = scmp.eq.s32.totalorder %s16, 0
      %p80 = por %p78, %p79
      %s82 = sadd.s32 %s81, 1
      %p85 = scmp.eq.s32.totalorder %s10, 7
      %p86 = scmp.ne.s32.totalorder %s81, %s83
      %p87 = scmp.eq.s32.totalorder %s10, 0
      %p88 = por %p86, %p87
      %p89 = scmp.ne.s32.totalorder %s81, %s83
      %p90 = scmp.eq.s32.totalorder %s15, 7
      %p91 = por %p89, %p90
      %p92 = scmp.ne.s32.totalorder %s83, %s84
      %p93 = scmp.eq.s32.totalorder %s15, 0
      %p94 = por %p92, %p93
      %p95 = scmp.ne.s32.totalorder %s83, %s84
      %p96 = scmp.eq.s32.totalorder %s16, 7
      %p97 = por %p95, %p96
      %p99 = scmp.ne.s32.totalorder %s84, %s98
      %p100 = scmp.eq.s32.totalorder %s16, 0
      %p101 = por %p99, %p100
      %p102 = scmp.le.s32.totalorder 1, %s10
      %p103 = scmp.lt.s32.totalorder %s10, 9
      %p104 = pnand %p102, %p103
      %p105 = pneg %p104
      // Predicated region
      $region9: #{lstm_classifier_bidirectional_forward.5} parent=5 // pred_check
        _
      $region10: #{lstm_classifier_bidirectional_forward.5} parent=5 // pred_check_branch
        %107 = sbr.rel (%p104) target = $region12
      $region11: #{lstm_classifier_bidirectional_forward.5} parent=5 // pred_region
        %s108 = ssub.s32 %s10, 1
        // Predicated region
        $region13: #{lstm_classifier_bidirectional_forward.5} parent=11 // pred_check
          %p109 = pneg %p31
        $region14: #{lstm_classifier_bidirectional_forward.5} parent=11 // pred_check_branch
          %111 = sbr.rel (%p109) target = $region16
        $region15: #{lstm_classifier_bidirectional_forward.5} parent=11 // pred_region
          _
        $region16: #{lstm_classifier_bidirectional_forward.5} parent=11 // pred_fallthru
          _
        // Predicated region
        $region17: #{lstm_classifier_bidirectional_forward.5} parent=11 // pred_check
          %p112 = pneg %p52
        $region18: #{lstm_classifier_bidirectional_forward.5} parent=11 // pred_check_branch
          %114 = sbr.rel (%p112) target = $region20
        $region19: #{lstm_classifier_bidirectional_forward.5} parent=11 // pred_region
          _
        $region20: #{lstm_classifier_bidirectional_forward.5} parent=11 // pred_fallthru
          _
        // Predicated region
        $region21: #{lstm_classifier_bidirectional_forward.5} parent=11 // pred_check
          %p115 = pneg %p73
        $region22: #{lstm_classifier_bidirectional_forward.5} parent=11 // pred_check_branch
          %117 = sbr.rel (%p115) target = $region24
        $region23: #{lstm_classifier_bidirectional_forward.5} parent=11 // pred_region
          %119 = vsyncadd [#allocation7], 0
          %s120 = sshll.u32 %s2, 4
          %s121 = int_to_ptr.hbm [resolvable:$true] %s120
          %s122 = sshll.u32 [#allocation6], 4
          %s123 = int_to_ptr.vmem [resolvable:$true] %s122
          %128 = dma.hbm_to_vmem [thread:$0]  %s121, 512, %s123, [#allocation7], 128, 128, 8
        $region24: #{lstm_classifier_bidirectional_forward.5} parent=11 // pred_fallthru
          _
      $region12: #{lstm_classifier_bidirectional_forward.5} parent=5 // pred_fallthru
        _
      %p129 = scmp.lt.s32.totalorder %s10, 8
      // Predicated region
      $region25: #{lstm_classifier_bidirectional_forward.5} parent=5 // pred_check
        %p130 = pneg %p129
      $region26: #{lstm_classifier_bidirectional_forward.5} parent=5 // pred_check_branch
        %132 = sbr.rel (%p130) target = $region28
      $region27: #{lstm_classifier_bidirectional_forward.5} parent=5 // pred_region
        _
      $region28: #{lstm_classifier_bidirectional_forward.5} parent=5 // pred_fallthru
        _
      %p133 = scmp.le.s32.totalorder 1, %s10
      %p134 = scmp.lt.s32.totalorder %s10, 9
      %p135 = pnand %p133, %p134
      %p136 = pneg %p135
      // Predicated region
      $region29: #{lstm_classifier_bidirectional_forward.5} parent=5 // pred_check
        _
      $region30: #{lstm_classifier_bidirectional_forward.5} parent=5 // pred_check_branch
        %138 = sbr.rel (%p135) target = $region32
      $region31: #{lstm_classifier_bidirectional_forward.5} parent=5 // pred_region
        %s139 = ssub.s32 %s10, 1
        // Predicated region
        $region33: #{lstm_classifier_bidirectional_forward.5} parent=31 // pred_check
          %p140 = pneg %p73
        $region34: #{lstm_classifier_bidirectional_forward.5} parent=31 // pred_check_branch
          %142 = sbr.rel (%p140) target = $region36
        $region35: #{lstm_classifier_bidirectional_forward.5} parent=31 // pred_region
          %144 = dma.done [#allocation7], 512
        $region36: #{lstm_classifier_bidirectional_forward.5} parent=31 // pred_fallthru
          _
        %p145 = pneg %p31
        %p146 = pneg %p28
        %p147 = pneg %p52
        %p148 = pneg %p49
        %p149 = pneg %p73
        %p150 = pneg %p70
        %p151 = pneg %p94
        %p152 = pneg %p91
        %p153 = scmp.eq.s32.totalorder %s15, 0
        // Predicated region
        $region37: #{lstm_classifier_bidirectional_forward.5} parent=31 // pred_check
          %p154 = pneg %p153
        $region38: #{lstm_classifier_bidirectional_forward.5} parent=31 // pred_check_branch
          %156 = sbr.rel (%p154) target = $region40
        $region39: #{lstm_classifier_bidirectional_forward.5} parent=31 // pred_region
          %vm157 = vcmask 254976
          %158 = vst.msk [vmem:[#allocation2] sm:$0x3] %vm157, 0.0
          %159 = vst.msk [vmem:[#allocation3] sm:$0x3] %vm157, 0.0
          %160 = vst.msk [vmem:[#allocation4] sm:$0x3] %vm157, 0.0
          %161 = vst.msk [vmem:[#allocation5] sm:$0x3] %vm157, 0.0
        $region40: #{lstm_classifier_bidirectional_forward.5} parent=31 // pred_fallthru
          _
        %s162 = ssub.s32 7, %s15
        %s163 = smul.u32 %s15, 2
        %s164 = smul.addr %s163, 2
        %s165 = scalar_lea.vmem %s0, %s164
        %v166 = vld [vmem:[%s165] sm:$0xf]
        %s167 = smul.u32 %s162, 2
        %s168 = smul.addr %s167, 2
        %s169 = scalar_lea.vmem %s0, %s168
        %v170 = vld [vmem:[%s169] sm:$0xf]
        %v171 = vld [vmem:[#allocation2] sm:$0x3]
        %v172 = vld [vmem:[%s1] sm:$0xff]
        %v173 = vld [vmem:[%s1 + $0x8] sm:$0xff]
        %v174 = vld [vmem:[%s1 + $0x10] sm:$0xff]
        %v175 = vld [vmem:[%s1 + $0x18] sm:$0xff]
        %vm176 = vcmask 261120
        %v178 = vsel %vm176, %v171, 0
        %180 = vmatpush.msra.mxu0 0.0
        %181 = vmatpush.msra.mxu0 0.0
        %182 = vmatpush.msra.mxu0 0.0
        %183 = vmatpush.msra.mxu0 0.0
        %184 = vmatpush.msra.mxu0 0.0
        %185 = vmatpush.msra.mxu0 0.0
        %186 = vmatpush.msra.mxu0 0.0
        %187 = vmatpush.msra.mxu0 0.0
        %188 = vmatpush.msra.mxu0 0.0
        %189 = vmatpush.msra.mxu0 0.0
        %190 = vmatpush.msra.mxu0 0.0
        %191 = vmatpush.msra.mxu0 0.0
        %192 = vmatpush.msra.mxu0 %v175
        %193 = vmatpush.msra.mxu0 %v174
        %194 = vmatpush.msra.mxu0 %v173
        %195 = vmatpush.msra.mxu0 %v172
        %196 = vmatmul.f32.gmra.mxu0 %v178
        %v197 = vpop.f32.mrf.mxu0
        %v198 = vadd.f32 0.0, %v197
        %199 = vdwg.mxu0
        %v200 = vadd.f32 %v166, %v198
        %v201 = vlaneseq
        %v202 = vand.u32 %v201, 127
        %vm203 = vcmp.ge.s32.totalorder %v202, 64
        %vm204 = vcmp.lt.s32.totalorder %v202, 96
        %vm205 = vmand %vm203, %vm204
        %v206 = vtanh.pop %v200
        %v207 = vxor.u32 %v200, 2147483648
        %v208 = vmul.f32 %v207, 1.442695
        %v209 = vpow.pop %v208
        %v210 = vadd.f32 %v209, 1.0
        %v211 = vrcp.pop %v210
        %v212 = vmul.f32 %v210, %v211
        %v213 = vsub.f32 1.0, %v212
        %v214 = vmul.f32 %v211, %v213
        %v215 = vadd.f32 %v211, %v214
        %vm216 = vweird.f32 %v210
        %vm217 = vweird.f32 %v211
        %vm218 = vmor %vm216, %vm217
        %v219 = vsel %vm218, %v211, %v215
        %v220 = vand.u32 2147483647, %v210
        %vm221 = vcmp.eq.f32.partialorder %v220, 8.507059e+37
        %v222 = vand.u32 %v210, 2147483648
        %v223 = vor.u32 1.1754944e-38, %v222
        %v224 = vsel %vm221, %v223, %v219
        %v225 = vmul.f32 1.0, %v224
        %v226 = vsel %vm205, %v206, %v225
        %v227 = vld [vmem:[#allocation3] sm:$0x3]
        %229 = vrot.lane.b32.xlu0 %v227, 32
        %v230 = vpop.permute.xlu0 %229
        %v232 = vmul.f32 %v226, %v230
        %234 = vrot.lane.b32.xlu0 %v226, 64
        %v235 = vpop.permute.xlu0 %234
        %v237 = vmul.f32 %v226, %v235
        %239 = vrot.lane.b32.xlu0 %v237, 32
        %v240 = vpop.permute.xlu0 %239
        %v242 = vadd.f32 %v232, %v240
        %v243 = vtanh.pop %v242
        %245 = vrot.lane.b32.xlu0 %v243, 64
        %v246 = vpop.permute.xlu0 %245
        %v248 = vmul.f32 %v226, %v246
        %250 = vrot.lane.b32.xlu0 %v242, 96
        %v251 = vpop.permute.xlu0 %250
        %vm253 = vcmask 254976
        %254 = vst.msk [vmem:[#allocation3] sm:$0x3] %vm253, %v251
        %256 = vrot.lane.b32.xlu0 %v248, 32
        %v257 = vpop.permute.xlu0 %256
        %259 = vst.msk [vmem:[#allocation2] sm:$0x3] %vm253, %v257
        %v260 = vld [vmem:[#allocation4] sm:$0x3]
        %v261 = vld [vmem:[#allocation6] sm:$0xff]
        %v262 = vld [vmem:[#allocation6 + $0x8] sm:$0xff]
        %v263 = vld [vmem:[#allocation6 + $0x10] sm:$0xff]
        %v264 = vld [vmem:[#allocation6 + $0x18] sm:$0xff]
        %v266 = vsel %vm176, %v260, 0
        %268 = vmatpush.msra.mxu0 0.0
        %269 = vmatpush.msra.mxu0 0.0
        %270 = vmatpush.msra.mxu0 0.0
        %271 = vmatpush.msra.mxu0 0.0
        %272 = vmatpush.msra.mxu0 0.0
        %273 = vmatpush.msra.mxu0 0.0
        %274 = vmatpush.msra.mxu0 0.0
        %275 = vmatpush.msra.mxu0 0.0
        %276 = vmatpush.msra.mxu0 0.0
        %277 = vmatpush.msra.mxu0 0.0
        %278 = vmatpush.msra.mxu0 0.0
        %279 = vmatpush.msra.mxu0 0.0
        %280 = vmatpush.msra.mxu0 %v264
        %281 = vmatpush.msra.mxu0 %v263
        %282 = vmatpush.msra.mxu0 %v262
        %283 = vmatpush.msra.mxu0 %v261
        %284 = vmatmul.f32.gmra.mxu0 %v266
        %v285 = vpop.f32.mrf.mxu0
        %v286 = vadd.f32 0.0, %v285
        %287 = vdwg.mxu0
        %v289 = vrot.slane %v170, 2
        %v291 = vadd.f32 %v289, %v286
        %v292 = vtanh.pop %v291
        %v293 = vxor.u32 %v291, 2147483648
        %v294 = vmul.f32 %v293, 1.442695
        %v295 = vpow.pop %v294
        %v296 = vadd.f32 %v295, 1.0
        %v297 = vrcp.pop %v296
        %v298 = vmul.f32 %v296, %v297
        %v299 = vsub.f32 1.0, %v298
        %v300 = vmul.f32 %v297, %v299
        %v301 = vadd.f32 %v297, %v300
        %vm302 = vweird.f32 %v296
        %vm303 = vweird.f32 %v297
        %vm304 = vmor %vm302, %vm303
        %v305 = vsel %vm304, %v297, %v301
        %v306 = vand.u32 2147483647, %v296
        %vm307 = vcmp.eq.f32.partialorder %v306, 8.507059e+37
        %v308 = vand.u32 %v296, 2147483648
        %v309 = vor.u32 1.1754944e-38, %v308
        %v310 = vsel %vm307, %v309, %v305
        %v311 = vmul.f32 1.0, %v310
        %v312 = vsel %vm205, %v292, %v311
        %v313 = vld [vmem:[#allocation5] sm:$0x3]
        %315 = vrot.lane.b32.xlu0 %v313, 32
        %v316 = vpop.permute.xlu0 %315
        %v318 = vmul.f32 %v312, %v316
        %320 = vrot.lane.b32.xlu0 %v312, 64
        %v321 = vpop.permute.xlu0 %320
        %v323 = vmul.f32 %v312, %v321
        %325 = vrot.lane.b32.xlu0 %v323, 32
        %v326 = vpop.permute.xlu0 %325
        %v328 = vadd.f32 %v318, %v326
        %v329 = vtanh.pop %v328
        %331 = vrot.lane.b32.xlu0 %v329, 64
        %v332 = vpop.permute.xlu0 %331
        %v334 = vmul.f32 %v312, %v332
        %336 = vrot.lane.b32.xlu0 %v328, 96
        %v337 = vpop.permute.xlu0 %336
        %339 = vst.msk [vmem:[#allocation5] sm:$0x3] %vm253, %v337
        %341 = vrot.lane.b32.xlu0 %v334, 32
        %v342 = vpop.permute.xlu0 %341
        %344 = vst.msk [vmem:[#allocation4] sm:$0x3] %vm253, %v342
        %s345 = scalar_lea.vmem %s3, %s163
        %346 = vst.msk [vmem:[%s345] sm:$0x3] %vm253, %v257
        %347 = vrot.lane.b32.xlu0 %v334, 64
        %v348 = vpop.permute.xlu0 %347
        %s350 = scalar_lea.vmem %s3, %s167
        %vm351 = vcmask 517376
        %352 = vst.msk [vmem:[%s350] sm:$0x3] %vm351, %v348
        // Predicated region
        $region41: #{lstm_classifier_bidirectional_forward.5} parent=31 // pred_check
          %p353 = pneg %p91
        $region42: #{lstm_classifier_bidirectional_forward.5} parent=31 // pred_check_branch
          %355 = sbr.rel (%p353) target = $region44
        $region43: #{lstm_classifier_bidirectional_forward.5} parent=31 // pred_region
          _
        $region44: #{lstm_classifier_bidirectional_forward.5} parent=31 // pred_fallthru
          _
        // Predicated region
        $region45: #{lstm_classifier_bidirectional_forward.5} parent=31 // pred_check
          %p356 = pneg %p91
        $region46: #{lstm_classifier_bidirectional_forward.5} parent=31 // pred_check_branch
          %358 = sbr.rel (%p356) target = $region48
        $region47: #{lstm_classifier_bidirectional_forward.5} parent=31 // pred_region
          _
        $region48: #{lstm_classifier_bidirectional_forward.5} parent=31 // pred_fallthru
          _
      $region32: #{lstm_classifier_bidirectional_forward.5} parent=5 // pred_fallthru
        _
      %p359 = scmp.le.s32.totalorder 2, %s10
      // Predicated region
      $region49: #{lstm_classifier_bidirectional_forward.5} parent=5 // pred_check
        %p360 = pneg %p359
      $region50: #{lstm_classifier_bidirectional_forward.5} parent=5 // pred_check_branch
        %362 = sbr.rel (%p360) target = $region52
      $region51: #{lstm_classifier_bidirectional_forward.5} parent=5 // pred_region
        %s363 = ssub.s32 %s10, 2
      $region52: #{lstm_classifier_bidirectional_forward.5} parent=5 // pred_fallthru
        _
    $region6: #{lstm_classifier_bidirectional_forward.5} parent=1 // loop_footer
      %s14 = sadd.s32 1, %s10
    $region7: #{lstm_classifier_bidirectional_forward.5} parent=1 // loop_footer_branch
      %9 = sbr.rel target = $region3
    $region8: #{lstm_classifier_bidirectional_forward.5} parent=1 // loop_exit
      _
    %364 = vsyncpa [#allocation7], 1
    %s365 = scalar_lea.sflag [#allocation7], 1
    %366 = vsyncpa %s365, 1

// kernel: lstm_classifier_bidirectional_forward.7
$region0: #{lstm_classifier_bidirectional_forward.7}
  #allocation0 [shape = 'u32[]', space=smem, size = 0x4, offset = 0x4, fixed_abs, tag = 'smem constant byte address 0x4 - core index']
  #allocation1 [shape = 'u32[72,128]{1,0:T(1,128)}', space=vmem, size = 0x9000, scoped, tag = 'internal scratch']
  #allocation2 [shape = 'f32[8,2,64]{2,1,0:T(2,128)}', space=vmem, size = 0x2000, scoped, tag = 'scratch operand']
  #allocation3 [shape = 'f32[2,32]{1,0:T(2,128)}', space=vmem, size = 0x400, scoped, tag = 'scratch operand']
  #allocation4 [shape = 'f32[2,32]{1,0:T(2,128)}', space=vmem, size = 0x400, scoped, tag = 'scratch operand']
  #allocation5 [shape = 'f32[2,32]{1,0:T(2,128)}', space=vmem, size = 0x400, scoped, tag = 'scratch operand']
  #allocation6 [shape = 'f32[2,32]{1,0:T(2,128)}', space=vmem, size = 0x400, scoped, tag = 'scratch operand']
  #allocation7 [shape = 'f32[1,1]{1,0:T(1,128)S(1)}', space=vmem, size = 0x200, scoped, tag = 'scoped memory for lstm_classifier_bidirectional_forward.7']
  %s0 = inlined_call_operand.vmem [shape: f32[8,2,256], index: 0, kind: input, shape index: {}]
  %s1 = inlined_call_operand.vmem [shape: f32[32,128], index: 1, kind: input, shape index: {}]
  %s2 = inlined_call_operand.vmem [shape: f32[32,128], index: 2, kind: input, shape index: {}]
  %s3 = inlined_call_operand.vmem [shape: f32[1,64], index: 3, kind: input, shape index: {}]
  %s4 = inlined_call_operand.<no memory space> [shape: f32[1,1], index: 4, kind: input, shape index: {}]
  %s5 = inlined_call_operand.vmem [shape: f32[8,2,1], index: 5, kind: output, shape index: {}]
  %s6 = sld [smem:[#allocation0]]
  $region61: #{lstm_classifier_bidirectional_forward.7} parent=0
    _
  %s8 = ssub.s32 1, %s6
  %s9 = scalar_select 0, %s8, %s6
  %v10 = vstv %s4
  %11 = vst [vmem:[#allocation7] sm:$0x1] %v10
  loop: start=0, step=1, limit=10
  $region2: #{lstm_classifier_bidirectional_forward.7} parent=0 // loop_pre_header
    _
  $region3: #{lstm_classifier_bidirectional_forward.7} parent=0 // loop_header
    %s13 = sphi 0, %s17
    %p14 = scmp.ge.s32.totalorder %s13, 10
    %s21 = sphi 0, %s21
    %s23 = sphi 0, %s21
    %s24 = sphi 0, %s23
    %s38 = sphi 0, %s24
    %s42 = sphi 0, %s42
    %s44 = sphi 0, %s42
    %s45 = sphi 0, %s44
    %s59 = sphi 0, %s45
    %s63 = sphi 0, %s63
    %s65 = sphi 0, %s63
    %s66 = sphi 0, %s65
    %s80 = sphi 0, %s66
    %s84 = sphi 0, %s84
    %s86 = sphi 0, %s84
    %s87 = sphi 0, %s86
    %s101 = sphi 0, %s87
    %s105 = sphi 0, %s105
    %s107 = sphi 0, %s105
    %s108 = sphi 0, %s107
    %s122 = sphi 0, %s108
    %s126 = sphi 0, %s126
    %s128 = sphi 0, %s126
    %s129 = sphi 0, %s128
    %s143 = sphi 0, %s129
  $region4: #{lstm_classifier_bidirectional_forward.7} parent=0 // loop_header_branch
    %16 = sbr.rel (%p14) target = $region8
  $region5: #{lstm_classifier_bidirectional_forward.7} parent=0 // loop_body
    %s18 = ssub.s32 %s13, 1
    %s19 = ssub.s32 %s13, 2
    %s20 = sadd.s32 %s13, 1
    %s22 = sadd.s32 %s21, 1
    %p25 = scmp.eq.s32.totalorder %s13, 7
    %p26 = scmp.ne.s32.totalorder %s21, %s23
    %p27 = scmp.eq.s32.totalorder %s13, 0
    %p28 = por %p26, %p27
    %p29 = scmp.ne.s32.totalorder %s21, %s23
    %p30 = scmp.eq.s32.totalorder %s18, 7
    %p31 = por %p29, %p30
    %p32 = scmp.ne.s32.totalorder %s23, %s24
    %p33 = scmp.eq.s32.totalorder %s18, 0
    %p34 = por %p32, %p33
    %p35 = scmp.ne.s32.totalorder %s23, %s24
    %p36 = scmp.eq.s32.totalorder %s19, 7
    %p37 = por %p35, %p36
    %p39 = scmp.ne.s32.totalorder %s24, %s38
    %p40 = scmp.eq.s32.totalorder %s19, 0
    %p41 = por %p39, %p40
    %s43 = sadd.s32 %s42, 1
    %p46 = scmp.eq.s32.totalorder %s13, 7
    %p47 = scmp.ne.s32.totalorder %s42, %s44
    %p48 = scmp.eq.s32.totalorder %s13, 0
    %p49 = por %p47, %p48
    %p50 = scmp.ne.s32.totalorder %s42, %s44
    %p51 = scmp.eq.s32.totalorder %s18, 7
    %p52 = por %p50, %p51
    %p53 = scmp.ne.s32.totalorder %s44, %s45
    %p54 = scmp.eq.s32.totalorder %s18, 0
    %p55 = por %p53, %p54
    %p56 = scmp.ne.s32.totalorder %s44, %s45
    %p57 = scmp.eq.s32.totalorder %s19, 7
    %p58 = por %p56, %p57
    %p60 = scmp.ne.s32.totalorder %s45, %s59
    %p61 = scmp.eq.s32.totalorder %s19, 0
    %p62 = por %p60, %p61
    %s64 = sadd.s32 %s63, 1
    %p67 = scmp.eq.s32.totalorder %s13, 7
    %p68 = scmp.ne.s32.totalorder %s63, %s65
    %p69 = scmp.eq.s32.totalorder %s13, 0
    %p70 = por %p68, %p69
    %p71 = scmp.ne.s32.totalorder %s63, %s65
    %p72 = scmp.eq.s32.totalorder %s18, 7
    %p73 = por %p71, %p72
    %p74 = scmp.ne.s32.totalorder %s65, %s66
    %p75 = scmp.eq.s32.totalorder %s18, 0
    %p76 = por %p74, %p75
    %p77 = scmp.ne.s32.totalorder %s65, %s66
    %p78 = scmp.eq.s32.totalorder %s19, 7
    %p79 = por %p77, %p78
    %p81 = scmp.ne.s32.totalorder %s66, %s80
    %p82 = scmp.eq.s32.totalorder %s19, 0
    %p83 = por %p81, %p82
    %s85 = sadd.s32 %s84, 1
    %p88 = scmp.eq.s32.totalorder %s13, 7
    %p89 = scmp.ne.s32.totalorder %s84, %s86
    %p90 = scmp.eq.s32.totalorder %s13, 0
    %p91 = por %p89, %p90
    %p92 = scmp.ne.s32.totalorder %s84, %s86
    %p93 = scmp.eq.s32.totalorder %s18, 7
    %p94 = por %p92, %p93
    %p95 = scmp.ne.s32.totalorder %s86, %s87
    %p96 = scmp.eq.s32.totalorder %s18, 0
    %p97 = por %p95, %p96
    %p98 = scmp.ne.s32.totalorder %s86, %s87
    %p99 = scmp.eq.s32.totalorder %s19, 7
    %p100 = por %p98, %p99
    %p102 = scmp.ne.s32.totalorder %s87, %s101
    %p103 = scmp.eq.s32.totalorder %s19, 0
    %p104 = por %p102, %p103
    %s106 = sadd.s32 %s105, 1
    %p109 = scmp.eq.s32.totalorder %s13, 7
    %p110 = scmp.ne.s32.totalorder %s105, %s107
    %p111 = scmp.eq.s32.totalorder %s13, 0
    %p112 = por %p110, %p111
    %p113 = scmp.ne.s32.totalorder %s105, %s107
    %p114 = scmp.eq.s32.totalorder %s18, 7
    %p115 = por %p113, %p114
    %p116 = scmp.ne.s32.totalorder %s107, %s108
    %p117 = scmp.eq.s32.totalorder %s18, 0
    %p118 = por %p116, %p117
    %p119 = scmp.ne.s32.totalorder %s107, %s108
    %p120 = scmp.eq.s32.totalorder %s19, 7
    %p121 = por %p119, %p120
    %p123 = scmp.ne.s32.totalorder %s108, %s122
    %p124 = scmp.eq.s32.totalorder %s19, 0
    %p125 = por %p123, %p124
    %s127 = sadd.s32 %s126, 1
    %p130 = scmp.eq.s32.totalorder %s13, 7
    %p131 = scmp.ne.s32.totalorder %s126, %s128
    %p132 = scmp.eq.s32.totalorder %s13, 0
    %p133 = por %p131, %p132
    %p134 = scmp.ne.s32.totalorder %s126, %s128
    %p135 = scmp.eq.s32.totalorder %s18, 7
    %p136 = por %p134, %p135
    %p137 = scmp.ne.s32.totalorder %s128, %s129
    %p138 = scmp.eq.s32.totalorder %s18, 0
    %p139 = por %p137, %p138
    %p140 = scmp.ne.s32.totalorder %s128, %s129
    %p141 = scmp.eq.s32.totalorder %s19, 7
    %p142 = por %p140, %p141
    %p144 = scmp.ne.s32.totalorder %s129, %s143
    %p145 = scmp.eq.s32.totalorder %s19, 0
    %p146 = por %p144, %p145
    %p147 = scmp.le.s32.totalorder 1, %s13
    %p148 = scmp.lt.s32.totalorder %s13, 9
    %p149 = pnand %p147, %p148
    %p150 = pneg %p149
    // Predicated region
    $region9: #{lstm_classifier_bidirectional_forward.7} parent=5 // pred_check
      _
    $region10: #{lstm_classifier_bidirectional_forward.7} parent=5 // pred_check_branch
      %152 = sbr.rel (%p149) target = $region12
    $region11: #{lstm_classifier_bidirectional_forward.7} parent=5 // pred_region
      %s153 = ssub.s32 %s13, 1
      // Predicated region
      $region13: #{lstm_classifier_bidirectional_forward.7} parent=11 // pred_check
        %p154 = pneg %p34
      $region14: #{lstm_classifier_bidirectional_forward.7} parent=11 // pred_check_branch
        %156 = sbr.rel (%p154) target = $region16
      $region15: #{lstm_classifier_bidirectional_forward.7} parent=11 // pred_region
        _
      $region16: #{lstm_classifier_bidirectional_forward.7} parent=11 // pred_fallthru
        _
      // Predicated region
      $region17: #{lstm_classifier_bidirectional_forward.7} parent=11 // pred_check
        %p157 = pneg %p55
      $region18: #{lstm_classifier_bidirectional_forward.7} parent=11 // pred_check_branch
        %159 = sbr.rel (%p157) target = $region20
      $region19: #{lstm_classifier_bidirectional_forward.7} parent=11 // pred_region
        _
      $region20: #{lstm_classifier_bidirectional_forward.7} parent=11 // pred_fallthru
        _
      // Predicated region
      $region21: #{lstm_classifier_bidirectional_forward.7} parent=11 // pred_check
        %p160 = pneg %p76
      $region22: #{lstm_classifier_bidirectional_forward.7} parent=11 // pred_check_branch
        %162 = sbr.rel (%p160) target = $region24
      $region23: #{lstm_classifier_bidirectional_forward.7} parent=11 // pred_region
        _
      $region24: #{lstm_classifier_bidirectional_forward.7} parent=11 // pred_fallthru
        _
      // Predicated region
      $region25: #{lstm_classifier_bidirectional_forward.7} parent=11 // pred_check
        %p163 = pneg %p97
      $region26: #{lstm_classifier_bidirectional_forward.7} parent=11 // pred_check_branch
        %165 = sbr.rel (%p163) target = $region28
      $region27: #{lstm_classifier_bidirectional_forward.7} parent=11 // pred_region
        _
      $region28: #{lstm_classifier_bidirectional_forward.7} parent=11 // pred_fallthru
        _
      // Predicated region
      $region29: #{lstm_classifier_bidirectional_forward.7} parent=11 // pred_check
        %p166 = pneg %p118
      $region30: #{lstm_classifier_bidirectional_forward.7} parent=11 // pred_check_branch
        %168 = sbr.rel (%p166) target = $region32
      $region31: #{lstm_classifier_bidirectional_forward.7} parent=11 // pred_region
        _
      $region32: #{lstm_classifier_bidirectional_forward.7} parent=11 // pred_fallthru
        _
    $region12: #{lstm_classifier_bidirectional_forward.7} parent=5 // pred_fallthru
      _
    %p169 = scmp.lt.s32.totalorder %s13, 8
    // Predicated region
    $region33: #{lstm_classifier_bidirectional_forward.7} parent=5 // pred_check
      %p170 = pneg %p169
    $region34: #{lstm_classifier_bidirectional_forward.7} parent=5 // pred_check_branch
      %172 = sbr.rel (%p170) target = $region36
    $region35: #{lstm_classifier_bidirectional_forward.7} parent=5 // pred_region
      _
    $region36: #{lstm_classifier_bidirectional_forward.7} parent=5 // pred_fallthru
      _
    %p173 = scmp.le.s32.totalorder 1, %s13
    %p174 = scmp.lt.s32.totalorder %s13, 9
    %p175 = pnand %p173, %p174
    %p176 = pneg %p175
    // Predicated region
    $region37: #{lstm_classifier_bidirectional_forward.7} parent=5 // pred_check
      _
    $region38: #{lstm_classifier_bidirectional_forward.7} parent=5 // pred_check_branch
      %178 = sbr.rel (%p175) target = $region40
    $region39: #{lstm_classifier_bidirectional_forward.7} parent=5 // pred_region
      %s179 = ssub.s32 %s13, 1
      %p180 = pneg %p34
      %p181 = pneg %p31
      %p182 = pneg %p55
      %p183 = pneg %p52
      %p184 = pneg %p76
      %p185 = pneg %p73
      %p186 = pneg %p97
      %p187 = pneg %p94
      %p188 = pneg %p118
      %p189 = pneg %p115
      %p190 = pneg %p139
      %p191 = pneg %p136
      %p192 = scmp.eq.s32.totalorder %s18, 0
      // Predicated region
      $region41: #{lstm_classifier_bidirectional_forward.7} parent=39 // pred_check
        %p193 = pneg %p192
      $region42: #{lstm_classifier_bidirectional_forward.7} parent=39 // pred_check_branch
        %195 = sbr.rel (%p193) target = $region44
      $region43: #{lstm_classifier_bidirectional_forward.7} parent=39 // pred_region
        %vm196 = vcmask 254976
        %197 = vst.msk [vmem:[#allocation3] sm:$0x3] %vm196, 0.0
        %198 = vst.msk [vmem:[#allocation4] sm:$0x3] %vm196, 0.0
        %199 = vst.msk [vmem:[#allocation5] sm:$0x3] %vm196, 0.0
        %200 = vst.msk [vmem:[#allocation6] sm:$0x3] %vm196, 0.0
      $region44: #{lstm_classifier_bidirectional_forward.7} parent=39 // pred_fallthru
        _
      %s201 = ssub.s32 7, %s18
      %s202 = smul.u32 %s18, 2
      %s203 = smul.addr %s202, 2
      %s204 = scalar_lea.vmem %s0, %s203
      %v205 = vld [vmem:[%s204] sm:$0xf]
      %s206 = smul.u32 %s201, 2
      %s207 = smul.addr %s206, 2
      %s208 = scalar_lea.vmem %s0, %s207
      %v209 = vld [vmem:[%s208] sm:$0xf]
      %v210 = vld [vmem:[#allocation3] sm:$0x3]
      %v211 = vld [vmem:[%s1] sm:$0xff]
      %v212 = vld [vmem:[%s1 + $0x8] sm:$0xff]
      %v213 = vld [vmem:[%s1 + $0x10] sm:$0xff]
      %v214 = vld [vmem:[%s1 + $0x18] sm:$0xff]
      %vm215 = vcmask 261120
      %v217 = vsel %vm215, %v210, 0
      %219 = vmatpush.msra.mxu0 0.0
      %220 = vmatpush.msra.mxu0 0.0
      %221 = vmatpush.msra.mxu0 0.0
      %222 = vmatpush.msra.mxu0 0.0
      %223 = vmatpush.msra.mxu0 0.0
      %224 = vmatpush.msra.mxu0 0.0
      %225 = vmatpush.msra.mxu0 0.0
      %226 = vmatpush.msra.mxu0 0.0
      %227 = vmatpush.msra.mxu0 0.0
      %228 = vmatpush.msra.mxu0 0.0
      %229 = vmatpush.msra.mxu0 0.0
      %230 = vmatpush.msra.mxu0 0.0
      %231 = vmatpush.msra.mxu0 %v214
      %232 = vmatpush.msra.mxu0 %v213
      %233 = vmatpush.msra.mxu0 %v212
      %234 = vmatpush.msra.mxu0 %v211
      %235 = vmatmul.f32.gmra.mxu0 %v217
      %v236 = vpop.f32.mrf.mxu0
      %v237 = vadd.f32 0.0, %v236
      %238 = vdwg.mxu0
      %v239 = vadd.f32 %v205, %v237
      %v240 = vlaneseq
      %v241 = vand.u32 %v240, 127
      %vm242 = vcmp.ge.s32.totalorder %v241, 64
      %vm243 = vcmp.lt.s32.totalorder %v241, 96
      %vm244 = vmand %vm242, %vm243
      %v245 = vtanh.pop %v239
      %v246 = vxor.u32 %v239, 2147483648
      %v247 = vmul.f32 %v246, 1.442695
      %v248 = vpow.pop %v247
      %v249 = vadd.f32 %v248, 1.0
      %v250 = vrcp.pop %v249
      %v251 = vmul.f32 %v249, %v250
      %v252 = vsub.f32 1.0, %v251
      %v253 = vmul.f32 %v250, %v252
      %v254 = vadd.f32 %v250, %v253
      %vm255 = vweird.f32 %v249
      %vm256 = vweird.f32 %v250
      %vm257 = vmor %vm255, %vm256
      %v258 = vsel %vm257, %v250, %v254
      %v259 = vand.u32 2147483647, %v249
      %vm260 = vcmp.eq.f32.partialorder %v259, 8.507059e+37
      %v261 = vand.u32 %v249, 2147483648
      %v262 = vor.u32 1.1754944e-38, %v261
      %v263 = vsel %vm260, %v262, %v258
      %v264 = vmul.f32 1.0, %v263
      %v265 = vsel %vm244, %v245, %v264
      %v266 = vld [vmem:[#allocation4] sm:$0x3]
      %268 = vrot.lane.b32.xlu0 %v266, 32
      %v269 = vpop.permute.xlu0 %268
      %v271 = vmul.f32 %v265, %v269
      %273 = vrot.lane.b32.xlu0 %v265, 64
      %v274 = vpop.permute.xlu0 %273
      %v276 = vmul.f32 %v265, %v274
      %278 = vrot.lane.b32.xlu0 %v276, 32
      %v279 = vpop.permute.xlu0 %278
      %v281 = vadd.f32 %v271, %v279
      %v282 = vtanh.pop %v281
      %284 = vrot.lane.b32.xlu0 %v282, 64
      %v285 = vpop.permute.xlu0 %284
      %v287 = vmul.f32 %v265, %v285
      %289 = vrot.lane.b32.xlu0 %v281, 96
      %v290 = vpop.permute.xlu0 %289
      %vm292 = vcmask 254976
      %293 = vst.msk [vmem:[#allocation4] sm:$0x3] %vm292, %v290
      %295 = vrot.lane.b32.xlu0 %v287, 32
      %v296 = vpop.permute.xlu0 %295
      %298 = vst.msk [vmem:[#allocation3] sm:$0x3] %vm292, %v296
      %v299 = vld [vmem:[#allocation5] sm:$0x3]
      %v300 = vld [vmem:[%s2] sm:$0xff]
      %v301 = vld [vmem:[%s2 + $0x8] sm:$0xff]
      %v302 = vld [vmem:[%s2 + $0x10] sm:$0xff]
      %v303 = vld [vmem:[%s2 + $0x18] sm:$0xff]
      %v305 = vsel %vm215, %v299, 0
      %307 = vmatpush.msra.mxu0 0.0
      %308 = vmatpush.msra.mxu0 0.0
      %309 = vmatpush.msra.mxu0 0.0
      %310 = vmatpush.msra.mxu0 0.0
      %311 = vmatpush.msra.mxu0 0.0
      %312 = vmatpush.msra.mxu0 0.0
      %313 = vmatpush.msra.mxu0 0.0
      %314 = vmatpush.msra.mxu0 0.0
      %315 = vmatpush.msra.mxu0 0.0
      %316 = vmatpush.msra.mxu0 0.0
      %317 = vmatpush.msra.mxu0 0.0
      %318 = vmatpush.msra.mxu0 0.0
      %319 = vmatpush.msra.mxu0 %v303
      %320 = vmatpush.msra.mxu0 %v302
      %321 = vmatpush.msra.mxu0 %v301
      %322 = vmatpush.msra.mxu0 %v300
      %323 = vmatmul.f32.gmra.mxu0 %v305
      %v324 = vpop.f32.mrf.mxu0
      %v325 = vadd.f32 0.0, %v324
      %326 = vdwg.mxu0
      %v328 = vrot.slane %v209, 2
      %v330 = vadd.f32 %v328, %v325
      %v331 = vtanh.pop %v330
      %v332 = vxor.u32 %v330, 2147483648
      %v333 = vmul.f32 %v332, 1.442695
      %v334 = vpow.pop %v333
      %v335 = vadd.f32 %v334, 1.0
      %v336 = vrcp.pop %v335
      %v337 = vmul.f32 %v335, %v336
      %v338 = vsub.f32 1.0, %v337
      %v339 = vmul.f32 %v336, %v338
      %v340 = vadd.f32 %v336, %v339
      %vm341 = vweird.f32 %v335
      %vm342 = vweird.f32 %v336
      %vm343 = vmor %vm341, %vm342
      %v344 = vsel %vm343, %v336, %v340
      %v345 = vand.u32 2147483647, %v335
      %vm346 = vcmp.eq.f32.partialorder %v345, 8.507059e+37
      %v347 = vand.u32 %v335, 2147483648
      %v348 = vor.u32 1.1754944e-38, %v347
      %v349 = vsel %vm346, %v348, %v344
      %v350 = vmul.f32 1.0, %v349
      %v351 = vsel %vm244, %v331, %v350
      %v352 = vld [vmem:[#allocation6] sm:$0x3]
      %354 = vrot.lane.b32.xlu0 %v352, 32
      %v355 = vpop.permute.xlu0 %354
      %v357 = vmul.f32 %v351, %v355
      %359 = vrot.lane.b32.xlu0 %v351, 64
      %v360 = vpop.permute.xlu0 %359
      %v362 = vmul.f32 %v351, %v360
      %364 = vrot.lane.b32.xlu0 %v362, 32
      %v365 = vpop.permute.xlu0 %364
      %v367 = vadd.f32 %v357, %v365
      %v368 = vtanh.pop %v367
      %370 = vrot.lane.b32.xlu0 %v368, 64
      %v371 = vpop.permute.xlu0 %370
      %v373 = vmul.f32 %v351, %v371
      %375 = vrot.lane.b32.xlu0 %v367, 96
      %v376 = vpop.permute.xlu0 %375
      %378 = vst.msk [vmem:[#allocation6] sm:$0x3] %vm292, %v376
      %380 = vrot.lane.b32.xlu0 %v373, 32
      %v381 = vpop.permute.xlu0 %380
      %383 = vst.msk [vmem:[#allocation5] sm:$0x3] %vm292, %v381
      %s384 = scalar_lea.vmem [#allocation2], %s202
      %385 = vst.msk [vmem:[%s384] sm:$0x3] %vm292, %v296
      %386 = vrot.lane.b32.xlu0 %v373, 64
      %v387 = vpop.permute.xlu0 %386
      %s389 = scalar_lea.vmem [#allocation2], %s206
      %vm390 = vcmask 517376
      %391 = vst.msk [vmem:[%s389] sm:$0x3] %vm390, %v387
      %p392 = scmp.eq.s32.totalorder %s18, 7
      // Predicated region
      $region45: #{lstm_classifier_bidirectional_forward.7} parent=39 // pred_check
        %p393 = pneg %p392
      $region46: #{lstm_classifier_bidirectional_forward.7} parent=39 // pred_check_branch
        %395 = sbr.rel (%p393) target = $region48
      $region47: #{lstm_classifier_bidirectional_forward.7} parent=39 // pred_region
        %v396 = vld [vmem:[#allocation2] sm:$0x3]
        %v397 = vld [vmem:[#allocation2 + $0x2] sm:$0x3]
        %v398 = vld [vmem:[#allocation2 + $0x4] sm:$0x3]
        %v399 = vld [vmem:[#allocation2 + $0x6] sm:$0x3]
        %v400 = vld [vmem:[#allocation2 + $0x8] sm:$0x3]
        %v401 = vld [vmem:[#allocation2 + $0xa] sm:$0x3]
        %v402 = vld [vmem:[#allocation2 + $0xc] sm:$0x3]
        %v403 = vld [vmem:[#allocation2 + $0xe] sm:$0x3]
        %v404 = vld [vmem:[%s3] sm:$0x1]
        %v406 = vperm.slane %v404, 0
        %v408 = vmul.f32 %v396, %v406
        %v409 = vmul.f32 %v397, %v406
        %v410 = vmul.f32 %v398, %v406
        %v411 = vmul.f32 %v399, %v406
        %v412 = vmul.f32 %v400, %v406
        %v413 = vmul.f32 %v401, %v406
        %v414 = vmul.f32 %v402, %v406
        %v415 = vmul.f32 %v403, %v406
        %vm416 = vcmask 517120
        %v417 = vsel %vm416, %v408, 0.0
        %418 = vadd.xlane.f32.xlu0 %v417
        %v419 = vpop.xlane.xlu0 %418
        %v420 = vsel %vm416, %v409, 0.0
        %421 = vadd.xlane.f32.xlu0 %v420
        %v422 = vpop.xlane.xlu0 %421
        %v423 = vsel %vm416, %v410, 0.0
        %424 = vadd.xlane.f32.xlu0 %v423
        %v425 = vpop.xlane.xlu0 %424
        %v426 = vsel %vm416, %v411, 0.0
        %427 = vadd.xlane.f32.xlu0 %v426
        %v428 = vpop.xlane.xlu0 %427
        %v429 = vsel %vm416, %v412, 0.0
        %430 = vadd.xlane.f32.xlu0 %v429
        %v431 = vpop.xlane.xlu0 %430
        %v432 = vsel %vm416, %v413, 0.0
        %433 = vadd.xlane.f32.xlu0 %v432
        %v434 = vpop.xlane.xlu0 %433
        %v435 = vsel %vm416, %v414, 0.0
        %436 = vadd.xlane.f32.xlu0 %v435
        %v437 = vpop.xlane.xlu0 %436
        %v438 = vsel %vm416, %v415, 0.0
        %439 = vadd.xlane.f32.xlu0 %v438
        %v440 = vpop.xlane.xlu0 %439
        %v441 = vld [vmem:[#allocation7] sm:$0x1]
        %v443 = vperm.slane %v441, 0
        %v445 = vadd.f32 %v419, %v443
        %v446 = vadd.f32 %v422, %v443
        %v447 = vadd.f32 %v425, %v443
        %v448 = vadd.f32 %v428, %v443
        %v449 = vadd.f32 %v431, %v443
        %v450 = vadd.f32 %v434, %v443
        %v451 = vadd.f32 %v437, %v443
        %v452 = vadd.f32 %v440, %v443
        %v453 = vxor.u32 %v445, 2147483648
        %v454 = vxor.u32 %v446, 2147483648
        %v455 = vxor.u32 %v447, 2147483648
        %v456 = vxor.u32 %v448, 2147483648
        %v457 = vxor.u32 %v449, 2147483648
        %v458 = vxor.u32 %v450, 2147483648
        %v459 = vxor.u32 %v451, 2147483648
        %v460 = vxor.u32 %v452, 2147483648
        %v461 = vmul.f32 %v453, 1.442695
        %v462 = vpow.pop %v461
        %v463 = vmul.f32 %v454, 1.442695
        %v464 = vpow.pop %v463
        %v465 = vmul.f32 %v455, 1.442695
        %v466 = vpow.pop %v465
        %v467 = vmul.f32 %v456, 1.442695
        %v468 = vpow.pop %v467
        %v469 = vmul.f32 %v457, 1.442695
        %v470 = vpow.pop %v469
        %v471 = vmul.f32 %v458, 1.442695
        %v472 = vpow.pop %v471
        %v473 = vmul.f32 %v459, 1.442695
        %v474 = vpow.pop %v473
        %v475 = vmul.f32 %v460, 1.442695
        %v476 = vpow.pop %v475
        %v477 = vadd.f32 %v462, 1.0
        %v478 = vadd.f32 %v464, 1.0
        %v479 = vadd.f32 %v466, 1.0
        %v480 = vadd.f32 %v468, 1.0
        %v481 = vadd.f32 %v470, 1.0
        %v482 = vadd.f32 %v472, 1.0
        %v483 = vadd.f32 %v474, 1.0
        %v484 = vadd.f32 %v476, 1.0
        %v485 = vrcp.pop %v477
        %v486 = vmul.f32 %v477, %v485
        %v487 = vsub.f32 1.0, %v486
        %v488 = vmul.f32 %v485, %v487
        %v489 = vadd.f32 %v485, %v488
        %vm490 = vweird.f32 %v477
        %vm491 = vweird.f32 %v485
        %vm492 = vmor %vm490, %vm491
        %v493 = vsel %vm492, %v485, %v489
        %v494 = vand.u32 2147483647, %v477
        %vm495 = vcmp.eq.f32.partialorder %v494, 8.507059e+37
        %v496 = vand.u32 %v477, 2147483648
        %v497 = vor.u32 1.1754944e-38, %v496
        %v498 = vsel %vm495, %v497, %v493
        %v499 = vmul.f32 1.0, %v498
        %v500 = vrcp.pop %v478
        %v501 = vmul.f32 %v478, %v500
        %v502 = vsub.f32 1.0, %v501
        %v503 = vmul.f32 %v500, %v502
        %v504 = vadd.f32 %v500, %v503
        %vm505 = vweird.f32 %v478
        %vm506 = vweird.f32 %v500
        %vm507 = vmor %vm505, %vm506
        %v508 = vsel %vm507, %v500, %v504
        %v509 = vand.u32 2147483647, %v478
        %vm510 = vcmp.eq.f32.partialorder %v509, 8.507059e+37
        %v511 = vand.u32 %v478, 2147483648
        %v512 = vor.u32 1.1754944e-38, %v511
        %v513 = vsel %vm510, %v512, %v508
        %v514 = vmul.f32 1.0, %v513
        %v515 = vrcp.pop %v479
        %v516 = vmul.f32 %v479, %v515
        %v517 = vsub.f32 1.0, %v516
        %v518 = vmul.f32 %v515, %v517
        %v519 = vadd.f32 %v515, %v518
        %vm520 = vweird.f32 %v479
        %vm521 = vweird.f32 %v515
        %vm522 = vmor %vm520, %vm521
        %v523 = vsel %vm522, %v515, %v519
        %v524 = vand.u32 2147483647, %v479
        %vm525 = vcmp.eq.f32.partialorder %v524, 8.507059e+37
        %v526 = vand.u32 %v479, 2147483648
        %v527 = vor.u32 1.1754944e-38, %v526
        %v528 = vsel %vm525, %v527, %v523
        %v529 = vmul.f32 1.0, %v528
        %v530 = vrcp.pop %v480
        %v531 = vmul.f32 %v480, %v530
        %v532 = vsub.f32 1.0, %v531
        %v533 = vmul.f32 %v530, %v532
        %v534 = vadd.f32 %v530, %v533
        %vm535 = vweird.f32 %v480
        %vm536 = vweird.f32 %v530
        %vm537 = vmor %vm535, %vm536
        %v538 = vsel %vm537, %v530, %v534
        %v539 = vand.u32 2147483647, %v480
        %vm540 = vcmp.eq.f32.partialorder %v539, 8.507059e+37
        %v541 = vand.u32 %v480, 2147483648
        %v542 = vor.u32 1.1754944e-38, %v541
        %v543 = vsel %vm540, %v542, %v538
        %v544 = vmul.f32 1.0, %v543
        %v545 = vrcp.pop %v481
        %v546 = vmul.f32 %v481, %v545
        %v547 = vsub.f32 1.0, %v546
        %v548 = vmul.f32 %v545, %v547
        %v549 = vadd.f32 %v545, %v548
        %vm550 = vweird.f32 %v481
        %vm551 = vweird.f32 %v545
        %vm552 = vmor %vm550, %vm551
        %v553 = vsel %vm552, %v545, %v549
        %v554 = vand.u32 2147483647, %v481
        %vm555 = vcmp.eq.f32.partialorder %v554, 8.507059e+37
        %v556 = vand.u32 %v481, 2147483648
        %v557 = vor.u32 1.1754944e-38, %v556
        %v558 = vsel %vm555, %v557, %v553
        %v559 = vmul.f32 1.0, %v558
        %v560 = vrcp.pop %v482
        %v561 = vmul.f32 %v482, %v560
        %v562 = vsub.f32 1.0, %v561
        %v563 = vmul.f32 %v560, %v562
        %v564 = vadd.f32 %v560, %v563
        %vm565 = vweird.f32 %v482
        %vm566 = vweird.f32 %v560
        %vm567 = vmor %vm565, %vm566
        %v568 = vsel %vm567, %v560, %v564
        %v569 = vand.u32 2147483647, %v482
        %vm570 = vcmp.eq.f32.partialorder %v569, 8.507059e+37
        %v571 = vand.u32 %v482, 2147483648
        %v572 = vor.u32 1.1754944e-38, %v571
        %v573 = vsel %vm570, %v572, %v568
        %v574 = vmul.f32 1.0, %v573
        %v575 = vrcp.pop %v483
        %v576 = vmul.f32 %v483, %v575
        %v577 = vsub.f32 1.0, %v576
        %v578 = vmul.f32 %v575, %v577
        %v579 = vadd.f32 %v575, %v578
        %vm580 = vweird.f32 %v483
        %vm581 = vweird.f32 %v575
        %vm582 = vmor %vm580, %vm581
        %v583 = vsel %vm582, %v575, %v579
        %v584 = vand.u32 2147483647, %v483
        %vm585 = vcmp.eq.f32.partialorder %v584, 8.507059e+37
        %v586 = vand.u32 %v483, 2147483648
        %v587 = vor.u32 1.1754944e-38, %v586
        %v588 = vsel %vm585, %v587, %v583
        %v589 = vmul.f32 1.0, %v588
        %v590 = vrcp.pop %v484
        %v591 = vmul.f32 %v484, %v590
        %v592 = vsub.f32 1.0, %v591
        %v593 = vmul.f32 %v590, %v592
        %v594 = vadd.f32 %v590, %v593
        %vm595 = vweird.f32 %v484
        %vm596 = vweird.f32 %v590
        %vm597 = vmor %vm595, %vm596
        %v598 = vsel %vm597, %v590, %v594
        %v599 = vand.u32 2147483647, %v484
        %vm600 = vcmp.eq.f32.partialorder %v599, 8.507059e+37
        %v601 = vand.u32 %v484, 2147483648
        %v602 = vor.u32 1.1754944e-38, %v601
        %v603 = vsel %vm600, %v602, %v598
        %v604 = vmul.f32 1.0, %v603
        %vm605 = vcmask 1024
        %606 = vst.msk [vmem:[%s5] sm:$0x3] %vm605, %v499
        %607 = vst.msk [vmem:[%s5 + $0x2] sm:$0x3] %vm605, %v514
        %608 = vst.msk [vmem:[%s5 + $0x4] sm:$0x3] %vm605, %v529
        %609 = vst.msk [vmem:[%s5 + $0x6] sm:$0x3] %vm605, %v544
        %610 = vst.msk [vmem:[%s5 + $0x8] sm:$0x3] %vm605, %v559
        %611 = vst.msk [vmem:[%s5 + $0xa] sm:$0x3] %vm605, %v574
        %612 = vst.msk [vmem:[%s5 + $0xc] sm:$0x3] %vm605, %v589
        %613 = vst.msk [vmem:[%s5 + $0xe] sm:$0x3] %vm605, %v604
      $region48: #{lstm_classifier_bidirectional_forward.7} parent=39 // pred_fallthru
        _
      // Predicated region
      $region49: #{lstm_classifier_bidirectional_forward.7} parent=39 // pred_check
        %p614 = pneg %p136
      $region50: #{lstm_classifier_bidirectional_forward.7} parent=39 // pred_check_branch
        %616 = sbr.rel (%p614) target = $region52
      $region51: #{lstm_classifier_bidirectional_forward.7} parent=39 // pred_region
        _
      $region52: #{lstm_classifier_bidirectional_forward.7} parent=39 // pred_fallthru
        _
      // Predicated region
      $region53: #{lstm_classifier_bidirectional_forward.7} parent=39 // pred_check
        %p617 = pneg %p136
      $region54: #{lstm_classifier_bidirectional_forward.7} parent=39 // pred_check_branch
        %619 = sbr.rel (%p617) target = $region56
      $region55: #{lstm_classifier_bidirectional_forward.7} parent=39 // pred_region
        _
      $region56: #{lstm_classifier_bidirectional_forward.7} parent=39 // pred_fallthru
        _
    $region40: #{lstm_classifier_bidirectional_forward.7} parent=5 // pred_fallthru
      _
    %p620 = scmp.le.s32.totalorder 2, %s13
    // Predicated region
    $region57: #{lstm_classifier_bidirectional_forward.7} parent=5 // pred_check
      %p621 = pneg %p620
    $region58: #{lstm_classifier_bidirectional_forward.7} parent=5 // pred_check_branch
      %623 = sbr.rel (%p621) target = $region60
    $region59: #{lstm_classifier_bidirectional_forward.7} parent=5 // pred_region
      %s624 = ssub.s32 %s13, 2
    $region60: #{lstm_classifier_bidirectional_forward.7} parent=5 // pred_fallthru
      _
  $region6: #{lstm_classifier_bidirectional_forward.7} parent=0 // loop_footer
    %s17 = sadd.s32 1, %s13
  $region7: #{lstm_classifier_bidirectional_forward.7} parent=0 // loop_footer_branch
    %12 = sbr.rel target = $region3
  $region8: #{lstm_classifier_bidirectional_forward.7} parent=0 // loop_exit
    _

</llo_original>
